<compile_context>
chip_gen: v7x
topology: tpu7x:2x2x1
jax: 0.10.0
libtpu: 0.0.40
codegen_flags: <defaults>
</compile_context>

<pallas_src>
import functools

import jax
import jax.numpy as jnp
from jax import lax
from jax.experimental import pallas as pl
from jax.experimental.pallas import tpu as pltpu

LEAKY_SLOPE = 0.01   # F.leaky_relu default
LANE = 128           # padded feature width (TPU lane count)
NUM_STAGES = 5       # 0: x@W1 prep, 1: gkan1, 2: gkan2, 3: gkan3+conv lift,
                     # 4: conv agg + heads (+decode)


def _leaky_relu(x):
    return jnp.where(x >= 0, x, LEAKY_SLOPE * x)


# ----------------------------------------------------------------------------
# Fused forward kernel
# grid = (stage, node_row_block); stage s+1 consumes every row block of stage s
# through shared VMEM scratch, so both grid axes are "arbitrary".
# ----------------------------------------------------------------------------
def _fused_kernel(ts_ref,                     # scalar-prefetch: (P,2) int32 in SMEM
                  adj_ref, x_ref, w1_ref, w2_ref, w3_ref,
                  wc_ref, bc_ref, wp_ref,
                  w1cat_ref, b1cat_ref, w2tf_ref, w2tg_ref, b2tf_ref, b2tg_ref,
                  tf_out_ref, tgt_out_ref, pred_ref,
                  xwa_ref, xwb_ref, gtf_ref, gtg_ref,
                  *, tm, n_pairs):
    s = pl.program_id(0)          # pipeline stage (0..4)
    i = pl.program_id(1)          # node row block
    nb = pl.num_programs(1)
    c = w1_ref.shape[1]           # padded feature width (= LANE)
    row0 = pl.multiple_of(i * tm, tm)
    f32, bf16 = jnp.float32, jnp.bfloat16

    def adj_rows():
        # adj is either fully VMEM-resident (slice this block's rows) or
        # streamed as a (tm, N) row panel (use the whole ref).
        if adj_ref.shape[0] == tm:
            return adj_ref[...]
        return adj_ref[pl.ds(row0, tm), :]

    # ---- stage 0: per-row-block prep  xwA[rows] = x[rows] @ W1 (no adj) ----
    # TODO(synk): GKAN internals (spline hidden=128, grid=150, order=1) are not
    #             in the provided source; graph-linear stand-in adj @ (x @ W).
    @pl.when(s == 0)
    def _():
        xb = x_ref[pl.ds(row0, tm), :]
        xwa_ref[pl.ds(row0, tm), :] = jnp.dot(
            xb, w1_ref[...], preferred_element_type=f32).astype(bf16)

    # ---- stage 1: GKAN1 aggregation + fused prep of GKAN2's xw -------------
    @pl.when(s == 1)
    def _():
        agg = jnp.dot(adj_rows(), xwa_ref[...], preferred_element_type=f32)
        h1 = _leaky_relu(agg).astype(bf16)
        xwb_ref[pl.ds(row0, tm), :] = jnp.dot(
            h1, w2_ref[...], preferred_element_type=f32).astype(bf16)

    # ---- stage 2: GKAN2 aggregation + fused prep of GKAN3's xw -------------
    @pl.when(s == 2)
    def _():
        agg = jnp.dot(adj_rows(), xwb_ref[...], preferred_element_type=f32)
        h2 = _leaky_relu(agg).astype(bf16)
        xwa_ref[pl.ds(row0, tm), :] = jnp.dot(
            h2, w3_ref[...], preferred_element_type=f32).astype(bf16)

    # ---- stage 3: GKAN3 aggregation + conv 1x1 channel lift (1 -> 64) ------
    @pl.when(s == 3)
    def _():
        agg = jnp.dot(adj_rows(), xwa_ref[...], preferred_element_type=f32)
        h3 = _leaky_relu(agg)
        col = h3[:, 0:1]                          # GKAN3's single real column
        # TODO(synk): GATKConv (Conv attention) internals not provided;
        #             stand-in: leaky_relu(adj @ (h3*Wc + bc) @ Wp).
        xwb_ref[pl.ds(row0, tm), :] = (col * wc_ref[...] + bc_ref[...]).astype(bf16)

    # ---- stage 4: conv aggregation + projection + both linear heads --------
    @pl.when(s == 4)
    def _():
        agg = jnp.dot(adj_rows(), xwb_ref[...], preferred_element_type=f32)
        embed = _leaky_relu(jnp.dot(agg.astype(bf16), wp_ref[...],
                                    preferred_element_type=f32)).astype(bf16)
        # TODO(synk): F.dropout(p=0.01) between the head linears is stochastic
        #             in the torch module (training=True); applied as identity.
        hcat = jnp.dot(embed, w1cat_ref[...],
                       preferred_element_type=f32) + b1cat_ref[...]
        h_tf = hcat[:, :c].astype(bf16)
        h_tg = hcat[:, c:].astype(bf16)
        tf_blk = jnp.dot(h_tf, w2tf_ref[...],
                         preferred_element_type=f32) + b2tf_ref[...]
        tg_blk = jnp.dot(h_tg, w2tg_ref[...],
                         preferred_element_type=f32) + b2tg_ref[...]
        # tf/tgt outputs are single full-array VMEM blocks (constant block
        # index) -> one HBM writeback at the very end; decode reads them back.
        tf_out_ref[pl.ds(row0, tm), :] = tf_blk
        tgt_out_ref[pl.ds(row0, tm), :] = tg_blk

    # ---- decode on the very last grid step (all head rows are in VMEM) -----
    @pl.when((s == NUM_STAGES - 1) & (i == nb - 1))
    def _():
        gtf_ref[...] = jnp.zeros(gtf_ref.shape, f32)
        gtg_ref[...] = jnp.zeros(gtg_ref.shape, f32)
        n_rows = tf_out_ref.shape[0]

        def gather_one(pair, carry):
            ti = jnp.clip(ts_ref[pair, 0], 0, n_rows - 1)
            gi = jnp.clip(ts_ref[pair, 1], 0, n_rows - 1)
            gtf_ref[pl.ds(pair, 1), :] = tf_out_ref[pl.ds(ti, 1), :]
            gtg_ref[pl.ds(pair, 1), :] = tgt_out_ref[pl.ds(gi, 1), :]
            return carry

        lax.fori_loop(0, n_pairs, gather_one, 0)
        prod = gtf_ref[...] * gtg_ref[...]
        ones_row = jnp.ones((1, prod.shape[1]), f32)
        # row-sums written lane-dense as a (1, Ppad) slab
        pred_ref[...] = lax.dot_general(
            ones_row, prod, (((1,), (1,)), ((), ())),
            preferred_element_type=f32)


# ----------------------------------------------------------------------------
# Wrapper: padding / weight packing / pallas_call
# ----------------------------------------------------------------------------
def _pad2(a, rows, cols):
    return jnp.pad(a, ((0, rows - a.shape[0]), (0, cols - a.shape[1])))


def _round_up(v, m):
    return (v + m - 1) // m * m


def ka4ganc_forward(params, x, adj, train_sample):
    n_raw = x.shape[0]
    p = train_sample.shape[0]
    c = LANE
    output_dim = params["tf_w2"].shape[1]
    f32, bf16 = jnp.float32, jnp.bfloat16

    # node-count padding (zero rows/cols are inert) + row-panel size
    if n_raw <= 256:
        n = _round_up(max(n_raw, 8), 8)
        tm = n
    else:
        n = _round_up(n_raw, 256)
        tm = 256
    nb = n // tm

    # zero-pad every feature dim to the 128-lane width (exact for linear maps,
    # zeros propagate through leaky_relu), cast MXU operands to bf16.
    x_p = _pad2(x, n, c).astype(bf16)
    adj_b = _pad2(adj, n, n).astype(bf16)
    w1 = _pad2(params["w_gkan1"], c, c).astype(bf16)
    w2 = _pad2(params["w_gkan2"], c, c).astype(bf16)
    w3 = _pad2(params["w_gkan3"], c, c).astype(bf16)
    wc = _pad2(params["w_conv"], 1, c).astype(f32)
    bc = _pad2(params["b_conv"], 1, c).astype(f32)
    wp = _pad2(params["w_proj"], c, c).astype(bf16)

    # first head layer concatenated into one 256-wide matmul; second head layer
    # kept as two independent (128,128) dots (no block-diag structural zeros).
    w1cat = jnp.concatenate([_pad2(params["tf_w1"], c, c),
                             _pad2(params["tgt_w1"], c, c)], axis=1).astype(bf16)
    b1cat = jnp.concatenate([_pad2(params["tf_b1"], 1, c),
                             _pad2(params["tgt_b1"], 1, c)], axis=1).astype(f32)
    w2tf = _pad2(params["tf_w2"], c, c).astype(bf16)
    w2tg = _pad2(params["tgt_w2"], c, c).astype(bf16)
    b2tf = _pad2(params["tf_b2"], 1, c).astype(f32)
    b2tg = _pad2(params["tgt_b2"], 1, c).astype(f32)

    ts = train_sample.astype(jnp.int32)      # scalar-prefetch gather indices
    p_pad = _round_up(max(p, 8), LANE)

    # adj residency: fetch adj exactly once (constant block index) when it fits
    # the VMEM budget (double-buffering accounted); else stream (tm,N) panels.
    adj_bytes = n * n * 2
    adj_resident = 2 * adj_bytes <= 28 * 1024 * 1024

    full = lambda shape: pl.BlockSpec(shape, lambda s, i, ts_: (0, 0))
    if adj_resident:
        adj_spec = pl.BlockSpec((n, n), lambda s, i, ts_: (0, 0))
    else:
        # only stages >= 1 touch adj; pin the panel index to 0 during stage 0
        adj_spec = pl.BlockSpec((tm, n),
                                lambda s, i, ts_: (jnp.where(s > 0, i, 0), 0))

    grid_spec = pltpu.PrefetchScalarGridSpec(
        num_scalar_prefetch=1,
        grid=(NUM_STAGES, nb),
        in_specs=[
            adj_spec,                 # adjacency (resident or streamed, bf16)
            full((n, c)),             # x (padded, fetched once)
            full((c, c)),             # w_gkan1
            full((c, c)),             # w_gkan2
            full((c, c)),             # w_gkan3
            full((1, c)),             # conv weight row (1 -> 64)
            full((1, c)),             # conv bias row
            full((c, c)),             # conv projection (64 -> hidden2)
            full((c, 2 * c)),         # [tf_w1 | tgt_w1]
            full((1, 2 * c)),         # [tf_b1 | tgt_b1]
            full((c, c)),             # tf_w2
            full((c, c)),             # tgt_w2
            full((1, c)),             # tf_b2
            full((1, c)),             # tgt_b2
        ],
        out_specs=[
            full((n, c)),             # tf embed (single final writeback)
            full((n, c)),             # target embed
            pl.BlockSpec((1, p_pad), lambda s, i, ts_: (0, 0)),  # pred row
        ],
        scratch_shapes=[
            pltpu.VMEM((n, c), bf16),      # xwA: ping pre-aggregation buffer
            pltpu.VMEM((n, c), bf16),      # xwB: pong pre-aggregation buffer
            pltpu.VMEM((p_pad, c), f32),   # gathered tf rows (decode)
            pltpu.VMEM((p_pad, c), f32),   # gathered target rows (decode)
        ],
    )

    # VMEM budget: raise the scoped limit only when the footprint needs it
    # (safe on v5e/v6e 128 MiB and v7x 64 MiB; demo shapes stay on defaults).
    est = (2 * adj_bytes) if adj_resident else (2 * tm * n * 2)
    est += 2 * n * c * 2                        # x
    est += 2 * (2 * n * c * 4)                  # tf/tgt output blocks
    est += 2 * n * c * 2 + 2 * p_pad * c * 4    # scratch
    est += 2 * (6 * c * c * 2 + 6 * c * 4)      # weights (generous)
    vmem_limit = None
    if est > 12 * 1024 * 1024:
        vmem_limit = min(int(est * 1.25) + (4 << 20), 96 * 1024 * 1024)

    kernel = functools.partial(_fused_kernel, tm=tm, n_pairs=p)

    tf_pad, tgt_pad, pred_row = pl.pallas_call(
        kernel,
        grid_spec=grid_spec,
        out_shape=(
            jax.ShapeDtypeStruct((n, c), f32),
            jax.ShapeDtypeStruct((n, c), f32),
            jax.ShapeDtypeStruct((1, p_pad), f32),
        ),
        compiler_params=pltpu.CompilerParams(
            # stage s+1 consumes stage s's rows through per-core VMEM scratch,
            # so neither grid axis can be megacore-'parallel'.
            # TODO(synk): a v7x dual-TC split would need VMEM_SHARED xw buffers
            #             + core_barrier at stage boundaries.
            dimension_semantics=("arbitrary", "arbitrary"),
            vmem_limit_bytes=vmem_limit,
        ),
    )(ts, adj_b, x_p, w1, w2, w3, wc, bc, wp,
      w1cat, b1cat, w2tf, w2tg, b2tf, b2tg)

    tf_embed = tf_pad[:n_raw, :output_dim]
    target_embed = tgt_pad[:n_raw, :output_dim]
    pred = pred_row[0, :p].reshape(p, 1)
    return pred, (tf_embed, target_embed)


# ----------------------------------------------------------------------------
# Parameter construction (deterministic, xavier-uniform style, gain=1.414)
# ----------------------------------------------------------------------------
def xavier(key, fan_in, fan_out, gain=1.414):
    bound = gain * jnp.sqrt(6.0 / (fan_in + fan_out))
    return jax.random.uniform(key, (fan_in, fan_out), jnp.float32, -bound, bound)


def init_params(key, input_dim, hidden2, hidden3, output_dim):
    keys = jax.random.split(key, 12)
    return {
        "w_gkan1": xavier(keys[0], input_dim, hidden2),
        "w_gkan2": xavier(keys[1], hidden2, hidden3),
        "w_gkan3": xavier(keys[2], hidden3, 1),
        "w_conv": xavier(keys[3], 1, 64),
        "b_conv": jnp.zeros((1, 64), jnp.float32),
        "w_proj": xavier(keys[4], 64, hidden2),
        "tf_w1": xavier(keys[5], hidden2, hidden3),
        "tf_b1": jnp.zeros((1, hidden3), jnp.float32),
        "tf_w2": xavier(keys[6], hidden3, output_dim),
        "tf_b2": jnp.zeros((1, output_dim), jnp.float32),
        "tgt_w1": xavier(keys[7], hidden2, hidden3),
        "tgt_b1": jnp.zeros((1, hidden3), jnp.float32),
        "tgt_w2": xavier(keys[8], hidden3, output_dim),
        "tgt_b2": jnp.zeros((1, output_dim), jnp.float32),
    }


if __name__ == "__main__":
    # small shapes consistent with the module
    N = 16            # number of graph nodes
    input_dim = 32
    hidden2_dim = 32
    hidden3_dim = 16
    output_dim = 16
    P = 8             # number of train pairs

    key = jax.random.PRNGKey(0)
    k_x, k_adj, k_samp, k_par = jax.random.split(key, 4)

    x = jax.random.normal(k_x, (N, input_dim), jnp.float32)
    adj_raw = jax.random.uniform(k_adj, (N, N), jnp.float32)
    adj = (adj_raw + adj_raw.T) * 0.5                 # symmetric dense adjacency
    train_sample = jax.random.randint(k_samp, (P, 2), 0, N)

    params = init_params(k_par, input_dim, hidden2_dim, hidden3_dim, output_dim)

    fwd = jax.jit(ka4ganc_forward)
    pred, (tf_embed, target_embed) = fwd(params, x, adj, train_sample)
    jax.block_until_ready(pred)

    assert pred.shape == (P, 1)
    assert tf_embed.shape == (N, output_dim)
    assert target_embed.shape == (N, output_dim)
    print("KERNEL_OK")
</pallas_src>

<mosaic_0001>
module attributes {stable_mosaic.version = 11 : i64} {
  func.func @_fused_kernel(%arg0: i32, %arg1: i32, %arg2: memref<8x2xi32, #tpu.memory_space<smem>>, %arg3: memref<16x16xbf16, #tpu.memory_space<vmem>>, %arg4: memref<16x128xbf16, #tpu.memory_space<vmem>>, %arg5: memref<128x128xbf16, #tpu.memory_space<vmem>>, %arg6: memref<128x128xbf16, #tpu.memory_space<vmem>>, %arg7: memref<128x128xbf16, #tpu.memory_space<vmem>>, %arg8: memref<1x128xf32, #tpu.memory_space<vmem>>, %arg9: memref<1x128xf32, #tpu.memory_space<vmem>>, %arg10: memref<128x128xbf16, #tpu.memory_space<vmem>>, %arg11: memref<128x256xbf16, #tpu.memory_space<vmem>>, %arg12: memref<1x256xf32, #tpu.memory_space<vmem>>, %arg13: memref<128x128xbf16, #tpu.memory_space<vmem>>, %arg14: memref<128x128xbf16, #tpu.memory_space<vmem>>, %arg15: memref<1x128xf32, #tpu.memory_space<vmem>>, %arg16: memref<1x128xf32, #tpu.memory_space<vmem>>, %arg17: memref<16x128xf32, #tpu.memory_space<vmem>>, %arg18: memref<16x128xf32, #tpu.memory_space<vmem>>, %arg19: memref<1x128xf32, #tpu.memory_space<vmem>>, %arg20: memref<16x128xbf16, #tpu.memory_space<vmem>>, %arg21: memref<16x128xbf16, #tpu.memory_space<vmem>>, %arg22: memref<128x128xf32, #tpu.memory_space<vmem>>, %arg23: memref<128x128xf32, #tpu.memory_space<vmem>>) attributes {dimension_semantics = [#tpu.dimension_semantics<arbitrary>, #tpu.dimension_semantics<arbitrary>], iteration_bounds = array<i64: 5, 1>, scalar_prefetch = 1 : i64, scratch_operands = 4 : i64, tpu.core_type = #tpu.core_type<tc>, window_params = [{pipeline_mode = #tpu.pipeline_mode<synchronous>, transform_indices = @transform_0, window_bounds = array<i64: 16, 16>}, {pipeline_mode = #tpu.pipeline_mode<synchronous>, transform_indices = @transform_1, window_bounds = array<i64: 16, 128>}, {pipeline_mode = #tpu.pipeline_mode<synchronous>, transform_indices = @transform_2, window_bounds = array<i64: 128, 128>}, {pipeline_mode = #tpu.pipeline_mode<synchronous>, transform_indices = @transform_3, window_bounds = array<i64: 128, 128>}, {pipeline_mode = #tpu.pipeline_mode<synchronous>, transform_indices = @transform_4, window_bounds = array<i64: 128, 128>}, {pipeline_mode = #tpu.pipeline_mode<synchronous>, transform_indices = @transform_5, window_bounds = array<i64: 1, 128>}, {pipeline_mode = #tpu.pipeline_mode<synchronous>, transform_indices = @transform_6, window_bounds = array<i64: 1, 128>}, {pipeline_mode = #tpu.pipeline_mode<synchronous>, transform_indices = @transform_7, window_bounds = array<i64: 128, 128>}, {pipeline_mode = #tpu.pipeline_mode<synchronous>, transform_indices = @transform_8, window_bounds = array<i64: 128, 256>}, {pipeline_mode = #tpu.pipeline_mode<synchronous>, transform_indices = @transform_9, window_bounds = array<i64: 1, 256>}, {pipeline_mode = #tpu.pipeline_mode<synchronous>, transform_indices = @transform_10, window_bounds = array<i64: 128, 128>}, {pipeline_mode = #tpu.pipeline_mode<synchronous>, transform_indices = @transform_11, window_bounds = array<i64: 128, 128>}, {pipeline_mode = #tpu.pipeline_mode<synchronous>, transform_indices = @transform_12, window_bounds = array<i64: 1, 128>}, {pipeline_mode = #tpu.pipeline_mode<synchronous>, transform_indices = @transform_13, window_bounds = array<i64: 1, 128>}, {pipeline_mode = #tpu.pipeline_mode<synchronous>, transform_indices = @transform_14, window_bounds = array<i64: 16, 128>}, {pipeline_mode = #tpu.pipeline_mode<synchronous>, transform_indices = @transform_15, window_bounds = array<i64: 16, 128>}, {pipeline_mode = #tpu.pipeline_mode<synchronous>, transform_indices = @transform_16, window_bounds = array<i64: 1, 128>}]} {
    %c16_i32 = arith.constant 16 : i32
    %0 = arith.muli %arg1, %c16_i32 : i32
    %1 = tpu.assume_multiple %0, 16 : i32
    %c0_i32 = arith.constant 0 : i32
    %2 = arith.cmpi eq, %arg0, %c0_i32 : i32
    %3 = arith.extui %2 : i1 to i32
    %c0_i32_0 = arith.constant 0 : i32
    %4 = arith.cmpi ne, %3, %c0_i32_0 : i32
    scf.if %4 {
      %22 = arith.index_cast %1 : i32 to index
      %c0 = arith.constant 0 : index
      %23 = vector.load %arg4[%22, %c0] : memref<16x128xbf16, #tpu.memory_space<vmem>>, vector<16x128xbf16>
      %c0_8 = arith.constant 0 : index
      %c0_9 = arith.constant 0 : index
      %24 = vector.load %arg5[%c0_8, %c0_9] : memref<128x128xbf16, #tpu.memory_space<vmem>>, vector<128x128xbf16>
      %cst = arith.constant dense<0.000000e+00> : vector<16x128xf32>
      %25 = tpu.matmul %23, %24, %cst {dimension_numbers = #tpu.dot_dimension_numbers<[1], [0], [0], [1], [0, 0, 1, 1], [], []>} : vector<16x128xbf16>, vector<128x128xbf16>, vector<16x128xf32> -> vector<16x128xf32>
      %26 = arith.truncf %25 : vector<16x128xf32> to vector<16x128xbf16>
      %27 = arith.index_cast %1 : i32 to index
      %c0_10 = arith.constant 0 : index
      %28 = vector.load %arg20[%27, %c0_10] : memref<16x128xbf16, #tpu.memory_space<vmem>>, vector<16x128xbf16>
      tpu.vector_store %arg20[%27, %c0_10], %26 {strides = array<i32>} : memref<16x128xbf16, #tpu.memory_space<vmem>>, vector<16x128xbf16>,
    } else {
    }
    %c1_i32 = arith.constant 1 : i32
    %5 = arith.cmpi eq, %arg0, %c1_i32 : i32
    %6 = arith.extui %5 : i1 to i32
    %c0_i32_1 = arith.constant 0 : i32
    %7 = arith.cmpi ne, %6, %c0_i32_1 : i32
    scf.if %7 {
      %c0 = arith.constant 0 : index
      %c0_8 = arith.constant 0 : index
      %22 = vector.load %arg3[%c0, %c0_8] : memref<16x16xbf16, #tpu.memory_space<vmem>>, vector<16x16xbf16>
      %c0_9 = arith.constant 0 : index
      %c0_10 = arith.constant 0 : index
      %23 = vector.load %arg20[%c0_9, %c0_10] : memref<16x128xbf16, #tpu.memory_space<vmem>>, vector<16x128xbf16>
      %cst = arith.constant dense<0.000000e+00> : vector<16x128xf32>
      %24 = tpu.matmul %22, %23, %cst {dimension_numbers = #tpu.dot_dimension_numbers<[1], [0], [0], [1], [0, 0, 1, 1], [], []>} : vector<16x16xbf16>, vector<16x128xbf16>, vector<16x128xf32> -> vector<16x128xf32>
      %cst_11 = arith.constant 0.000000e+00 : f32
      %25 = vector.broadcast %cst_11 : f32 to vector<16x128xf32>
      %26 = arith.cmpf oge, %24, %25 : vector<16x128xf32>
      %cst_12 = arith.constant 0.00999999977 : f32
      %27 = vector.broadcast %cst_12 : f32 to vector<16x128xf32>
      %28 = arith.mulf %27, %24 : vector<16x128xf32>
      %29 = arith.select %26, %24, %28 : vector<16x128xi1>, vector<16x128xf32>
      %30 = arith.truncf %29 : vector<16x128xf32> to vector<16x128xbf16>
      %c0_13 = arith.constant 0 : index
      %c0_14 = arith.constant 0 : index
      %31 = vector.load %arg6[%c0_13, %c0_14] : memref<128x128xbf16, #tpu.memory_space<vmem>>, vector<128x128xbf16>
      %cst_15 = arith.constant dense<0.000000e+00> : vector<16x128xf32>
      %32 = tpu.matmul %30, %31, %cst_15 {dimension_numbers = #tpu.dot_dimension_numbers<[1], [0], [0], [1], [0, 0, 1, 1], [], []>} : vector<16x128xbf16>, vector<128x128xbf16>, vector<16x128xf32> -> vector<16x128xf32>
      %33 = arith.truncf %32 : vector<16x128xf32> to vector<16x128xbf16>
      %34 = arith.index_cast %1 : i32 to index
      %c0_16 = arith.constant 0 : index
      %35 = vector.load %arg21[%34, %c0_16] : memref<16x128xbf16, #tpu.memory_space<vmem>>, vector<16x128xbf16>
      tpu.vector_store %arg21[%34, %c0_16], %33 {strides = array<i32>} : memref<16x128xbf16, #tpu.memory_space<vmem>>, vector<16x128xbf16>,
    } else {
    }
    %c2_i32 = arith.constant 2 : i32
    %8 = arith.cmpi eq, %arg0, %c2_i32 : i32
    %9 = arith.extui %8 : i1 to i32
    %c0_i32_2 = arith.constant 0 : i32
    %10 = arith.cmpi ne, %9, %c0_i32_2 : i32
    scf.if %10 {
      %c0 = arith.constant 0 : index
      %c0_8 = arith.constant 0 : index
      %22 = vector.load %arg3[%c0, %c0_8] : memref<16x16xbf16, #tpu.memory_space<vmem>>, vector<16x16xbf16>
      %c0_9 = arith.constant 0 : index
      %c0_10 = arith.constant 0 : index
      %23 = vector.load %arg21[%c0_9, %c0_10] : memref<16x128xbf16, #tpu.memory_space<vmem>>, vector<16x128xbf16>
      %cst = arith.constant dense<0.000000e+00> : vector<16x128xf32>
      %24 = tpu.matmul %22, %23, %cst {dimension_numbers = #tpu.dot_dimension_numbers<[1], [0], [0], [1], [0, 0, 1, 1], [], []>} : vector<16x16xbf16>, vector<16x128xbf16>, vector<16x128xf32> -> vector<16x128xf32>
      %cst_11 = arith.constant 0.000000e+00 : f32
      %25 = vector.broadcast %cst_11 : f32 to vector<16x128xf32>
      %26 = arith.cmpf oge, %24, %25 : vector<16x128xf32>
      %cst_12 = arith.constant 0.00999999977 : f32
      %27 = vector.broadcast %cst_12 : f32 to vector<16x128xf32>
      %28 = arith.mulf %27, %24 : vector<16x128xf32>
      %29 = arith.select %26, %24, %28 : vector<16x128xi1>, vector<16x128xf32>
      %30 = arith.truncf %29 : vector<16x128xf32> to vector<16x128xbf16>
      %c0_13 = arith.constant 0 : index
      %c0_14 = arith.constant 0 : index
      %31 = vector.load %arg7[%c0_13, %c0_14] : memref<128x128xbf16, #tpu.memory_space<vmem>>, vector<128x128xbf16>
      %cst_15 = arith.constant dense<0.000000e+00> : vector<16x128xf32>
      %32 = tpu.matmul %30, %31, %cst_15 {dimension_numbers = #tpu.dot_dimension_numbers<[1], [0], [0], [1], [0, 0, 1, 1], [], []>} : vector<16x128xbf16>, vector<128x128xbf16>, vector<16x128xf32> -> vector<16x128xf32>
      %33 = arith.truncf %32 : vector<16x128xf32> to vector<16x128xbf16>
      %34 = arith.index_cast %1 : i32 to index
      %c0_16 = arith.constant 0 : index
      %35 = vector.load %arg20[%34, %c0_16] : memref<16x128xbf16, #tpu.memory_space<vmem>>, vector<16x128xbf16>
      tpu.vector_store %arg20[%34, %c0_16], %33 {strides = array<i32>} : memref<16x128xbf16, #tpu.memory_space<vmem>>, vector<16x128xbf16>,
    } else {
    }
    %c3_i32 = arith.constant 3 : i32
    %11 = arith.cmpi eq, %arg0, %c3_i32 : i32
    %12 = arith.extui %11 : i1 to i32
    %c0_i32_3 = arith.constant 0 : i32
    %13 = arith.cmpi ne, %12, %c0_i32_3 : i32
    scf.if %13 {
      %c0 = arith.constant 0 : index
      %c0_8 = arith.constant 0 : index
      %22 = vector.load %arg3[%c0, %c0_8] : memref<16x16xbf16, #tpu.memory_space<vmem>>, vector<16x16xbf16>
      %c0_9 = arith.constant 0 : index
      %c0_10 = arith.constant 0 : index
      %23 = vector.load %arg20[%c0_9, %c0_10] : memref<16x128xbf16, #tpu.memory_space<vmem>>, vector<16x128xbf16>
      %cst = arith.constant dense<0.000000e+00> : vector<16x128xf32>
      %24 = tpu.matmul %22, %23, %cst {dimension_numbers = #tpu.dot_dimension_numbers<[1], [0], [0], [1], [0, 0, 1, 1], [], []>} : vector<16x16xbf16>, vector<16x128xbf16>, vector<16x128xf32> -> vector<16x128xf32>
      %cst_11 = arith.constant 0.000000e+00 : f32
      %25 = vector.broadcast %cst_11 : f32 to vector<16x128xf32>
      %26 = arith.cmpf oge, %24, %25 : vector<16x128xf32>
      %cst_12 = arith.constant 0.00999999977 : f32
      %27 = vector.broadcast %cst_12 : f32 to vector<16x128xf32>
      %28 = arith.mulf %27, %24 : vector<16x128xf32>
      %29 = arith.select %26, %24, %28 : vector<16x128xi1>, vector<16x128xf32>
      %30 = vector.extract_strided_slice %29 {offsets = [0, 0], sizes = [16, 1], strides = [1, 1]} : vector<16x128xf32> to vector<16x1xf32>
      %c0_13 = arith.constant 0 : index
      %c0_14 = arith.constant 0 : index
      %31 = vector.load %arg8[%c0_13, %c0_14] : memref<1x128xf32, #tpu.memory_space<vmem>>, vector<1x128xf32>
      %32 = vector.broadcast %30 : vector<16x1xf32> to vector<16x128xf32>
      %33 = vector.broadcast %31 : vector<1x128xf32> to vector<16x128xf32>
      %34 = arith.mulf %32, %33 : vector<16x128xf32>
      %c0_15 = arith.constant 0 : index
      %c0_16 = arith.constant 0 : index
      %35 = vector.load %arg9[%c0_15, %c0_16] : memref<1x128xf32, #tpu.memory_space<vmem>>, vector<1x128xf32>
      %36 = vector.broadcast %35 : vector<1x128xf32> to vector<16x128xf32>
      %37 = arith.addf %34, %36 : vector<16x128xf32>
      %38 = arith.truncf %37 : vector<16x128xf32> to vector<16x128xbf16>
      %39 = arith.index_cast %1 : i32 to index
      %c0_17 = arith.constant 0 : index
      %40 = vector.load %arg21[%39, %c0_17] : memref<16x128xbf16, #tpu.memory_space<vmem>>, vector<16x128xbf16>
      tpu.vector_store %arg21[%39, %c0_17], %38 {strides = array<i32>} : memref<16x128xbf16, #tpu.memory_space<vmem>>, vector<16x128xbf16>,
    } else {
    }
    %c4_i32 = arith.constant 4 : i32
    %14 = arith.cmpi eq, %arg0, %c4_i32 : i32
    %15 = arith.extui %14 : i1 to i32
    %c0_i32_4 = arith.constant 0 : i32
    %16 = arith.cmpi ne, %15, %c0_i32_4 : i32
    scf.if %16 {
      %c0 = arith.constant 0 : index
      %c0_8 = arith.constant 0 : index
      %22 = vector.load %arg3[%c0, %c0_8] : memref<16x16xbf16, #tpu.memory_space<vmem>>, vector<16x16xbf16>
      %c0_9 = arith.constant 0 : index
      %c0_10 = arith.constant 0 : index
      %23 = vector.load %arg21[%c0_9, %c0_10] : memref<16x128xbf16, #tpu.memory_space<vmem>>, vector<16x128xbf16>
      %cst = arith.constant dense<0.000000e+00> : vector<16x128xf32>
      %24 = tpu.matmul %22, %23, %cst {dimension_numbers = #tpu.dot_dimension_numbers<[1], [0], [0], [1], [0, 0, 1, 1], [], []>} : vector<16x16xbf16>, vector<16x128xbf16>, vector<16x128xf32> -> vector<16x128xf32>
      %25 = arith.truncf %24 : vector<16x128xf32> to vector<16x128xbf16>
      %c0_11 = arith.constant 0 : index
      %c0_12 = arith.constant 0 : index
      %26 = vector.load %arg10[%c0_11, %c0_12] : memref<128x128xbf16, #tpu.memory_space<vmem>>, vector<128x128xbf16>
      %cst_13 = arith.constant dense<0.000000e+00> : vector<16x128xf32>
      %27 = tpu.matmul %25, %26, %cst_13 {dimension_numbers = #tpu.dot_dimension_numbers<[1], [0], [0], [1], [0, 0, 1, 1], [], []>} : vector<16x128xbf16>, vector<128x128xbf16>, vector<16x128xf32> -> vector<16x128xf32>
      %cst_14 = arith.constant 0.000000e+00 : f32
      %28 = vector.broadcast %cst_14 : f32 to vector<16x128xf32>
      %29 = arith.cmpf oge, %27, %28 : vector<16x128xf32>
      %cst_15 = arith.constant 0.00999999977 : f32
      %30 = vector.broadcast %cst_15 : f32 to vector<16x128xf32>
      %31 = arith.mulf %30, %27 : vector<16x128xf32>
      %32 = arith.select %29, %27, %31 : vector<16x128xi1>, vector<16x128xf32>
      %33 = arith.truncf %32 : vector<16x128xf32> to vector<16x128xbf16>
      %c0_16 = arith.constant 0 : index
      %c0_17 = arith.constant 0 : index
      %34 = vector.load %arg11[%c0_16, %c0_17] : memref<128x256xbf16, #tpu.memory_space<vmem>>, vector<128x256xbf16>
      %cst_18 = arith.constant dense<0.000000e+00> : vector<16x256xf32>
      %35 = tpu.matmul %33, %34, %cst_18 {dimension_numbers = #tpu.dot_dimension_numbers<[1], [0], [0], [1], [0, 0, 1, 1], [], []>} : vector<16x128xbf16>, vector<128x256xbf16>, vector<16x256xf32> -> vector<16x256xf32>
      %c0_19 = arith.constant 0 : index
      %c0_20 = arith.constant 0 : index
      %36 = vector.load %arg12[%c0_19, %c0_20] : memref<1x256xf32, #tpu.memory_space<vmem>>, vector<1x256xf32>
      %37 = vector.broadcast %36 : vector<1x256xf32> to vector<16x256xf32>
      %38 = arith.addf %35, %37 : vector<16x256xf32>
      %39 = vector.extract_strided_slice %38 {offsets = [0, 0], sizes = [16, 128], strides = [1, 1]} : vector<16x256xf32> to vector<16x128xf32>
      %40 = arith.truncf %39 : vector<16x128xf32> to vector<16x128xbf16>
      %41 = vector.extract_strided_slice %38 {offsets = [0, 128], sizes = [16, 128], strides = [1, 1]} : vector<16x256xf32> to vector<16x128xf32>
      %42 = arith.truncf %41 : vector<16x128xf32> to vector<16x128xbf16>
      %c0_21 = arith.constant 0 : index
      %c0_22 = arith.constant 0 : index
      %43 = vector.load %arg13[%c0_21, %c0_22] : memref<128x128xbf16, #tpu.memory_space<vmem>>, vector<128x128xbf16>
      %cst_23 = arith.constant dense<0.000000e+00> : vector<16x128xf32>
      %44 = tpu.matmul %40, %43, %cst_23 {dimension_numbers = #tpu.dot_dimension_numbers<[1], [0], [0], [1], [0, 0, 1, 1], [], []>} : vector<16x128xbf16>, vector<128x128xbf16>, vector<16x128xf32> -> vector<16x128xf32>
      %c0_24 = arith.constant 0 : index
      %c0_25 = arith.constant 0 : index
      %45 = vector.load %arg15[%c0_24, %c0_25] : memref<1x128xf32, #tpu.memory_space<vmem>>, vector<1x128xf32>
      %46 = vector.broadcast %45 : vector<1x128xf32> to vector<16x128xf32>
      %47 = arith.addf %44, %46 : vector<16x128xf32>
      %c0_26 = arith.constant 0 : index
      %c0_27 = arith.constant 0 : index
      %48 = vector.load %arg14[%c0_26, %c0_27] : memref<128x128xbf16, #tpu.memory_space<vmem>>, vector<128x128xbf16>
      %cst_28 = arith.constant dense<0.000000e+00> : vector<16x128xf32>
      %49 = tpu.matmul %42, %48, %cst_28 {dimension_numbers = #tpu.dot_dimension_numbers<[1], [0], [0], [1], [0, 0, 1, 1], [], []>} : vector<16x128xbf16>, vector<128x128xbf16>, vector<16x128xf32> -> vector<16x128xf32>
      %c0_29 = arith.constant 0 : index
      %c0_30 = arith.constant 0 : index
      %50 = vector.load %arg16[%c0_29, %c0_30] : memref<1x128xf32, #tpu.memory_space<vmem>>, vector<1x128xf32>
      %51 = vector.broadcast %50 : vector<1x128xf32> to vector<16x128xf32>
      %52 = arith.addf %49, %51 : vector<16x128xf32>
      %53 = arith.index_cast %1 : i32 to index
      %c0_31 = arith.constant 0 : index
      %54 = vector.load %arg17[%53, %c0_31] : memref<16x128xf32, #tpu.memory_space<vmem>>, vector<16x128xf32>
      tpu.vector_store %arg17[%53, %c0_31], %47 {strides = array<i32>} : memref<16x128xf32, #tpu.memory_space<vmem>>, vector<16x128xf32>,
      %55 = arith.index_cast %1 : i32 to index
      %c0_32 = arith.constant 0 : index
      %56 = vector.load %arg18[%55, %c0_32] : memref<16x128xf32, #tpu.memory_space<vmem>>, vector<16x128xf32>
      tpu.vector_store %arg18[%55, %c0_32], %52 {strides = array<i32>} : memref<16x128xf32, #tpu.memory_space<vmem>>, vector<16x128xf32>,
    } else {
    }
    %c4_i32_5 = arith.constant 4 : i32
    %17 = arith.cmpi eq, %arg0, %c4_i32_5 : i32
    %c0_i32_6 = arith.constant 0 : i32
    %18 = arith.cmpi eq, %arg1, %c0_i32_6 : i32
    %19 = arith.andi %17, %18 : i1
    %20 = arith.extui %19 : i1 to i32
    %c0_i32_7 = arith.constant 0 : i32
    %21 = arith.cmpi ne, %20, %c0_i32_7 : i32
    scf.if %21 {
      %cst = arith.constant 0.000000e+00 : f32
      %22 = vector.broadcast %cst : f32 to vector<128x128xf32>
      %c0 = arith.constant 0 : index
      %c0_8 = arith.constant 0 : index
      %23 = vector.load %arg22[%c0, %c0_8] : memref<128x128xf32, #tpu.memory_space<vmem>>, vector<128x128xf32>
      tpu.vector_store %arg22[%c0, %c0_8], %22 {strides = array<i32>} : memref<128x128xf32, #tpu.memory_space<vmem>>, vector<128x128xf32>,
      %cst_9 = arith.constant 0.000000e+00 : f32
      %24 = vector.broadcast %cst_9 : f32 to vector<128x128xf32>
      %c0_10 = arith.constant 0 : index
      %c0_11 = arith.constant 0 : index
      %25 = vector.load %arg23[%c0_10, %c0_11] : memref<128x128xf32, #tpu.memory_space<vmem>>, vector<128x128xf32>
      tpu.vector_store %arg23[%c0_10, %c0_11], %24 {strides = array<i32>} : memref<128x128xf32, #tpu.memory_space<vmem>>, vector<128x128xf32>,
      %c0_i32_12 = arith.constant 0 : i32
      %c8_i32 = arith.constant 8 : i32
      %26 = arith.addi %c0_i32_12, %c8_i32 : i32
      %c1_i32_13 = arith.constant 1 : i32
      scf.for %arg24 = %c0_i32_12 to %26 step %c1_i32_13  : i32 {
        %33 = arith.index_cast %arg24 : i32 to index
        %c0_23 = arith.constant 0 : index
        %34 = memref.load %arg2[%33, %c0_23] : memref<8x2xi32, #tpu.memory_space<smem>>
        %c0_i32_24 = arith.constant 0 : i32
        %c15_i32 = arith.constant 15 : i32
        %35 = arith.maxsi %c0_i32_24, %34 : i32
        %36 = arith.minsi %c15_i32, %35 : i32
        %37 = arith.index_cast %arg24 : i32 to index
        %c1 = arith.constant 1 : index
        %38 = memref.load %arg2[%37, %c1] : memref<8x2xi32, #tpu.memory_space<smem>>
        %c0_i32_25 = arith.constant 0 : i32
        %c15_i32_26 = arith.constant 15 : i32
        %39 = arith.maxsi %c0_i32_25, %38 : i32
        %40 = arith.minsi %c15_i32_26, %39 : i32
        %41 = arith.index_cast %36 : i32 to index
        %c0_27 = arith.constant 0 : index
        %42 = vector.load %arg17[%41, %c0_27] : memref<16x128xf32, #tpu.memory_space<vmem>>, vector<1x128xf32>
        %43 = arith.index_cast %arg24 : i32 to index
        %c0_28 = arith.constant 0 : index
        %44 = vector.load %arg22[%43, %c0_28] : memref<128x128xf32, #tpu.memory_space<vmem>>, vector<1x128xf32>
        tpu.vector_store %arg22[%43, %c0_28], %42 {strides = array<i32>} : memref<128x128xf32, #tpu.memory_space<vmem>>, vector<1x128xf32>,
        %45 = arith.index_cast %40 : i32 to index
        %c0_29 = arith.constant 0 : index
        %46 = vector.load %arg18[%45, %c0_29] : memref<16x128xf32, #tpu.memory_space<vmem>>, vector<1x128xf32>
        %47 = arith.index_cast %arg24 : i32 to index
        %c0_30 = arith.constant 0 : index
        %48 = vector.load %arg23[%47, %c0_30] : memref<128x128xf32, #tpu.memory_space<vmem>>, vector<1x128xf32>
        tpu.vector_store %arg23[%47, %c0_30], %46 {strides = array<i32>} : memref<128x128xf32, #tpu.memory_space<vmem>>, vector<1x128xf32>,
      }
      %c8_i32_14 = arith.constant 8 : i32
      %c0_15 = arith.constant 0 : index
      %c0_16 = arith.constant 0 : index
      %27 = vector.load %arg22[%c0_15, %c0_16] : memref<128x128xf32, #tpu.memory_space<vmem>>, vector<128x128xf32>
      %c0_17 = arith.constant 0 : index
      %c0_18 = arith.constant 0 : index
      %28 = vector.load %arg23[%c0_17, %c0_18] : memref<128x128xf32, #tpu.memory_space<vmem>>, vector<128x128xf32>
      %29 = arith.mulf %27, %28 : vector<128x128xf32>
      %cst_19 = arith.constant 1.000000e+00 : f32
      %30 = vector.broadcast %cst_19 : f32 to vector<1x128xf32>
      %cst_20 = arith.constant dense<0.000000e+00> : vector<1x128xf32>
      %31 = tpu.matmul %30, %29, %cst_20 {dimension_numbers = #tpu.dot_dimension_numbers<[1], [1], [0], [0], [0, 0, 1, 0], [], []>} : vector<1x128xf32>, vector<128x128xf32>, vector<1x128xf32> -> vector<1x128xf32>
      %c0_21 = arith.constant 0 : index
      %c0_22 = arith.constant 0 : index
      %32 = vector.load %arg19[%c0_21, %c0_22] : memref<1x128xf32, #tpu.memory_space<vmem>>, vector<1x128xf32>
      tpu.vector_store %arg19[%c0_21, %c0_22], %31 {strides = array<i32>} : memref<1x128xf32, #tpu.memory_space<vmem>>, vector<1x128xf32>,
    } else {
    }
    return
  }
  func.func @transform_0(%arg0: i32, %arg1: i32, %arg2: memref<8x2xi32, #tpu.memory_space<smem>>) -> (i32, i32) {
    %c0_i32 = arith.constant 0 : i32
    %c0_i32_0 = arith.constant 0 : i32
    %c0_i32_1 = arith.constant 0 : i32
    return %c0_i32, %c0_i32_0 : i32, i32
  }
  func.func @transform_1(%arg0: i32, %arg1: i32, %arg2: memref<8x2xi32, #tpu.memory_space<smem>>) -> (i32, i32) {
    %c0_i32 = arith.constant 0 : i32
    %c0_i32_0 = arith.constant 0 : i32
    %c0_i32_1 = arith.constant 0 : i32
    return %c0_i32, %c0_i32_0 : i32, i32
  }
  func.func @transform_2(%arg0: i32, %arg1: i32, %arg2: memref<8x2xi32, #tpu.memory_space<smem>>) -> (i32, i32) {
    %c0_i32 = arith.constant 0 : i32
    %c0_i32_0 = arith.constant 0 : i32
    %c0_i32_1 = arith.constant 0 : i32
    return %c0_i32, %c0_i32_0 : i32, i32
  }
  func.func @transform_3(%arg0: i32, %arg1: i32, %arg2: memref<8x2xi32, #tpu.memory_space<smem>>) -> (i32, i32) {
    %c0_i32 = arith.constant 0 : i32
    %c0_i32_0 = arith.constant 0 : i32
    %c0_i32_1 = arith.constant 0 : i32
    return %c0_i32, %c0_i32_0 : i32, i32
  }
  func.func @transform_4(%arg0: i32, %arg1: i32, %arg2: memref<8x2xi32, #tpu.memory_space<smem>>) -> (i32, i32) {
    %c0_i32 = arith.constant 0 : i32
    %c0_i32_0 = arith.constant 0 : i32
    %c0_i32_1 = arith.constant 0 : i32
    return %c0_i32, %c0_i32_0 : i32, i32
  }
  func.func @transform_5(%arg0: i32, %arg1: i32, %arg2: memref<8x2xi32, #tpu.memory_space<smem>>) -> (i32, i32) {
    %c0_i32 = arith.constant 0 : i32
    %c0_i32_0 = arith.constant 0 : i32
    %c0_i32_1 = arith.constant 0 : i32
    return %c0_i32, %c0_i32_0 : i32, i32
  }
  func.func @transform_6(%arg0: i32, %arg1: i32, %arg2: memref<8x2xi32, #tpu.memory_space<smem>>) -> (i32, i32) {
    %c0_i32 = arith.constant 0 : i32
    %c0_i32_0 = arith.constant 0 : i32
    %c0_i32_1 = arith.constant 0 : i32
    return %c0_i32, %c0_i32_0 : i32, i32
  }
  func.func @transform_7(%arg0: i32, %arg1: i32, %arg2: memref<8x2xi32, #tpu.memory_space<smem>>) -> (i32, i32) {
    %c0_i32 = arith.constant 0 : i32
    %c0_i32_0 = arith.constant 0 : i32
    %c0_i32_1 = arith.constant 0 : i32
    return %c0_i32, %c0_i32_0 : i32, i32
  }
  func.func @transform_8(%arg0: i32, %arg1: i32, %arg2: memref<8x2xi32, #tpu.memory_space<smem>>) -> (i32, i32) {
    %c0_i32 = arith.constant 0 : i32
    %c0_i32_0 = arith.constant 0 : i32
    %c0_i32_1 = arith.constant 0 : i32
    return %c0_i32, %c0_i32_0 : i32, i32
  }
  func.func @transform_9(%arg0: i32, %arg1: i32, %arg2: memref<8x2xi32, #tpu.memory_space<smem>>) -> (i32, i32) {
    %c0_i32 = arith.constant 0 : i32
    %c0_i32_0 = arith.constant 0 : i32
    %c0_i32_1 = arith.constant 0 : i32
    return %c0_i32, %c0_i32_0 : i32, i32
  }
  func.func @transform_10(%arg0: i32, %arg1: i32, %arg2: memref<8x2xi32, #tpu.memory_space<smem>>) -> (i32, i32) {
    %c0_i32 = arith.constant 0 : i32
    %c0_i32_0 = arith.constant 0 : i32
    %c0_i32_1 = arith.constant 0 : i32
    return %c0_i32, %c0_i32_0 : i32, i32
  }
  func.func @transform_11(%arg0: i32, %arg1: i32, %arg2: memref<8x2xi32, #tpu.memory_space<smem>>) -> (i32, i32) {
    %c0_i32 = arith.constant 0 : i32
    %c0_i32_0 = arith.constant 0 : i32
    %c0_i32_1 = arith.constant 0 : i32
    return %c0_i32, %c0_i32_0 : i32, i32
  }
  func.func @transform_12(%arg0: i32, %arg1: i32, %arg2: memref<8x2xi32, #tpu.memory_space<smem>>) -> (i32, i32) {
    %c0_i32 = arith.constant 0 : i32
    %c0_i32_0 = arith.constant 0 : i32
    %c0_i32_1 = arith.constant 0 : i32
    return %c0_i32, %c0_i32_0 : i32, i32
  }
  func.func @transform_13(%arg0: i32, %arg1: i32, %arg2: memref<8x2xi32, #tpu.memory_space<smem>>) -> (i32, i32) {
    %c0_i32 = arith.constant 0 : i32
    %c0_i32_0 = arith.constant 0 : i32
    %c0_i32_1 = arith.constant 0 : i32
    return %c0_i32, %c0_i32_0 : i32, i32
  }
  func.func @transform_14(%arg0: i32, %arg1: i32, %arg2: memref<8x2xi32, #tpu.memory_space<smem>>) -> (i32, i32) {
    %c0_i32 = arith.constant 0 : i32
    %c0_i32_0 = arith.constant 0 : i32
    %c0_i32_1 = arith.constant 0 : i32
    return %c0_i32, %c0_i32_0 : i32, i32
  }
  func.func @transform_15(%arg0: i32, %arg1: i32, %arg2: memref<8x2xi32, #tpu.memory_space<smem>>) -> (i32, i32) {
    %c0_i32 = arith.constant 0 : i32
    %c0_i32_0 = arith.constant 0 : i32
    %c0_i32_1 = arith.constant 0 : i32
    return %c0_i32, %c0_i32_0 : i32, i32
  }
  func.func @transform_16(%arg0: i32, %arg1: i32, %arg2: memref<8x2xi32, #tpu.memory_space<smem>>) -> (i32, i32) {
    %c0_i32 = arith.constant 0 : i32
    %c0_i32_0 = arith.constant 0 : i32
    %c0_i32_1 = arith.constant 0 : i32
    return %c0_i32, %c0_i32_0 : i32, i32
  }
}

</mosaic_0001>

<llo_original>
// kernel: ka4ganc_forward.1
$region0: #{ka4ganc_forward.1}
  #allocation0 [shape = 'u32[]', space=smem, size = 0x4, offset = 0x4, fixed_abs, tag = 'smem constant byte address 0x4 - core index']
  #allocation1 [shape = 'u32[144,128]{1,0:T(1,128)}', space=vmem, size = 0x12000, scoped, tag = 'internal scratch']
  #allocation2 [shape = 'bf16[16,128]{1,0:T(16,128)(2,1)}', space=vmem, size = 0x1000, scoped, tag = 'scratch operand']
  #allocation3 [shape = 'bf16[16,128]{1,0:T(16,128)(2,1)}', space=vmem, size = 0x1000, scoped, tag = 'scratch operand']
  #allocation4 [shape = 'f32[128,128]{1,0:T(8,128)}', space=vmem, size = 0x10000, scoped, tag = 'scratch operand']
  #allocation5 [shape = 'f32[128,128]{1,0:T(8,128)}', space=vmem, size = 0x10000, scoped, tag = 'scratch operand']
  #allocation6 [shape = 's32[1]{0}', space=sflag, size = 0x4, scoped, tag = 'scoped memory for ka4ganc_forward.1']
  #allocation7 [shape = 'u8[4096]{0}', space=smem, size = 0x1000, scoped, tag = 'prefetched SMEM operand 0']
  %s0 = inlined_call_operand.vmem [shape: s32[8,2], index: 0, kind: input, shape index: {}]
  %s1 = inlined_call_operand.vmem [shape: bf16[16,16], index: 1, kind: input, shape index: {}]
  %s2 = inlined_call_operand.vmem [shape: bf16[16,128], index: 2, kind: input, shape index: {}]
  %s3 = inlined_call_operand.vmem [shape: bf16[128,128], index: 3, kind: input, shape index: {}]
  %s4 = inlined_call_operand.vmem [shape: bf16[128,128], index: 4, kind: input, shape index: {}]
  %s5 = inlined_call_operand.vmem [shape: bf16[128,128], index: 5, kind: input, shape index: {}]
  %s6 = inlined_call_operand.vmem [shape: f32[1,128], index: 6, kind: input, shape index: {}]
  %s7 = inlined_call_operand.vmem [shape: f32[1,128], index: 7, kind: input, shape index: {}]
  %s8 = inlined_call_operand.vmem [shape: bf16[128,128], index: 8, kind: input, shape index: {}]
  %s9 = inlined_call_operand.vmem [shape: bf16[128,256], index: 9, kind: input, shape index: {}]
  %s10 = inlined_call_operand.vmem [shape: f32[1,256], index: 10, kind: input, shape index: {}]
  %s11 = inlined_call_operand.vmem [shape: bf16[128,128], index: 11, kind: input, shape index: {}]
  %s12 = inlined_call_operand.vmem [shape: bf16[128,128], index: 12, kind: input, shape index: {}]
  %s13 = inlined_call_operand.vmem [shape: f32[1,128], index: 13, kind: input, shape index: {}]
  %s14 = inlined_call_operand.vmem [shape: f32[1,128], index: 14, kind: input, shape index: {}]
  %s15 = inlined_call_operand.hbm [shape: f32[16,128], index: 15, kind: output, shape index: {0}]
  %s16 = inlined_call_operand.hbm [shape: f32[16,128], index: 16, kind: output, shape index: {1}]
  %s17 = inlined_call_operand.vmem [shape: f32[1,128], index: 17, kind: output, shape index: {2}]
  %18 = xla_tuple %s15, %s16, %s17
  %s19 = sld [smem:[#allocation0]]
  $region136: #{ka4ganc_forward.1} parent=0
    _
  %s21 = ssub.s32 1, %s19
  %s22 = scalar_select 0, %s21, %s19
  %s23 = sshll.u32 %s0, 4
  %s24 = int_to_ptr.vmem [resolvable:$true] %s23
  %26 = dma.vmem_to_smem %s24, 128, [#allocation7], [#allocation6]
  %27 = dma.done [#allocation6], 128
  %28 = sfence
  $region1: #{ka4ganc_forward.1} parent=0
    #allocation8 [shape = 'u8[8192]{0}', space=vmem, size = 0x2000, scoped, tag = 'output window, operand 0, single buffered']
    #allocation9 [shape = 's32[2]{0}', space=sflag, size = 0x8, scoped, tag = 'scoped memory for ka4ganc_forward.1']
    #allocation10 [shape = 'u8[8192]{0}', space=vmem, size = 0x2000, scoped, tag = 'output window, operand 1, single buffered']
    #allocation11 [shape = 's32[1]{0}', space=sflag, size = 0x4, scoped, tag = 'scoped memory for ka4ganc_forward.1']
    %29 = vsyncpa [#allocation9], 0
    %30 = vsyncpa [#allocation11], 0
    loop: start=0, step=1, limit=7
    $region2: #{ka4ganc_forward.1} parent=1 // loop_pre_header
      _
    $region3: #{ka4ganc_forward.1} parent=1 // loop_header
      %s32 = sphi 0, %s36
      %p33 = scmp.ge.s32.totalorder %s32, 7
      %s39 = sphi 0, %s51
      %s40 = sphi 0, %s47
      %s41 = sphi 0, %s39
      %s42 = sphi 0, %s40
      %s43 = sphi 0, %s41
      %s44 = sphi 0, %s42
      %s52 = sphi 0, %s52
      %s54 = sphi 0, %s52
      %s55 = sphi 0, %s54
      %s69 = sphi 0, %s55
      %s73 = sphi 0, %s73
      %s75 = sphi 0, %s73
      %s76 = sphi 0, %s75
      %s90 = sphi 0, %s76
      %s94 = sphi 0, %s94
      %s96 = sphi 0, %s94
      %s97 = sphi 0, %s96
      %s111 = sphi 0, %s97
      %s115 = sphi 0, %s115
      %s117 = sphi 0, %s115
      %s118 = sphi 0, %s117
      %s132 = sphi 0, %s118
      %s136 = sphi 0, %s136
      %s138 = sphi 0, %s136
      %s139 = sphi 0, %s138
      %s153 = sphi 0, %s139
      %s157 = sphi 0, %s157
      %s159 = sphi 0, %s157
      %s160 = sphi 0, %s159
      %s174 = sphi 0, %s160
      %s178 = sphi 0, %s178
      %s180 = sphi 0, %s178
      %s181 = sphi 0, %s180
      %s195 = sphi 0, %s181
      %s199 = sphi 0, %s199
      %s201 = sphi 0, %s199
      %s202 = sphi 0, %s201
      %s216 = sphi 0, %s202
      %s220 = sphi 0, %s220
      %s222 = sphi 0, %s220
      %s223 = sphi 0, %s222
      %s237 = sphi 0, %s223
      %s241 = sphi 0, %s241
      %s243 = sphi 0, %s241
      %s244 = sphi 0, %s243
      %s258 = sphi 0, %s244
      %s262 = sphi 0, %s262
      %s264 = sphi 0, %s262
      %s265 = sphi 0, %s264
      %s279 = sphi 0, %s265
      %s283 = sphi 0, %s283
      %s285 = sphi 0, %s283
      %s286 = sphi 0, %s285
      %s300 = sphi 0, %s286
      %s304 = sphi 0, %s304
      %s306 = sphi 0, %s304
      %s307 = sphi 0, %s306
      %s321 = sphi 0, %s307
      %s325 = sphi 0, %s325
      %s327 = sphi 0, %s325
      %s328 = sphi 0, %s327
      %s342 = sphi 0, %s328
      %s346 = sphi 0, %s346
      %s348 = sphi 0, %s346
      %s349 = sphi 0, %s348
      %s363 = sphi 0, %s349
      %s367 = sphi 0, %s367
      %s369 = sphi 0, %s367
      %s370 = sphi 0, %s369
      %s384 = sphi 0, %s370
      %s388 = sphi 0, %s388
      %s390 = sphi 0, %s388
      %s391 = sphi 0, %s390
      %s405 = sphi 0, %s391
    $region4: #{ka4ganc_forward.1} parent=1 // loop_header_branch
      %35 = sbr.rel (%p33) target = $region8
    $region5: #{ka4ganc_forward.1} parent=1 // loop_body
      %s37 = ssub.s32 %s32, 1
      %s38 = ssub.s32 %s32, 2
      %s45 = sadd.s32 1, %s40
      %p46 = scmp.ge.s32.totalorder %s45, 1
      %s47 = scalar_select %p46, 0, %s45
      %s48 = sadd.s32 1, %s39
      %s49 = scalar_select %p46, %s48, %s39
      %p50 = scmp.ge.s32.totalorder %s49, 5
      %s51 = scalar_select %p50, 0, %s49
      %s53 = sadd.s32 %s52, 1
      %p56 = scmp.eq.s32.totalorder %s32, 4
      %p57 = scmp.ne.s32.totalorder %s52, %s54
      %p58 = scmp.eq.s32.totalorder %s32, 0
      %p59 = por %p57, %p58
      %p60 = scmp.ne.s32.totalorder %s52, %s54
      %p61 = scmp.eq.s32.totalorder %s37, 4
      %p62 = por %p60, %p61
      %p63 = scmp.ne.s32.totalorder %s54, %s55
      %p64 = scmp.eq.s32.totalorder %s37, 0
      %p65 = por %p63, %p64
      %p66 = scmp.ne.s32.totalorder %s54, %s55
      %p67 = scmp.eq.s32.totalorder %s38, 4
      %p68 = por %p66, %p67
      %p70 = scmp.ne.s32.totalorder %s55, %s69
      %p71 = scmp.eq.s32.totalorder %s38, 0
      %p72 = por %p70, %p71
      %s74 = sadd.s32 %s73, 1
      %p77 = scmp.eq.s32.totalorder %s32, 4
      %p78 = scmp.ne.s32.totalorder %s73, %s75
      %p79 = scmp.eq.s32.totalorder %s32, 0
      %p80 = por %p78, %p79
      %p81 = scmp.ne.s32.totalorder %s73, %s75
      %p82 = scmp.eq.s32.totalorder %s37, 4
      %p83 = por %p81, %p82
      %p84 = scmp.ne.s32.totalorder %s75, %s76
      %p85 = scmp.eq.s32.totalorder %s37, 0
      %p86 = por %p84, %p85
      %p87 = scmp.ne.s32.totalorder %s75, %s76
      %p88 = scmp.eq.s32.totalorder %s38, 4
      %p89 = por %p87, %p88
      %p91 = scmp.ne.s32.totalorder %s76, %s90
      %p92 = scmp.eq.s32.totalorder %s38, 0
      %p93 = por %p91, %p92
      %s95 = sadd.s32 %s94, 1
      %p98 = scmp.eq.s32.totalorder %s32, 4
      %p99 = scmp.ne.s32.totalorder %s94, %s96
      %p100 = scmp.eq.s32.totalorder %s32, 0
      %p101 = por %p99, %p100
      %p102 = scmp.ne.s32.totalorder %s94, %s96
      %p103 = scmp.eq.s32.totalorder %s37, 4
      %p104 = por %p102, %p103
      %p105 = scmp.ne.s32.totalorder %s96, %s97
      %p106 = scmp.eq.s32.totalorder %s37, 0
      %p107 = por %p105, %p106
      %p108 = scmp.ne.s32.totalorder %s96, %s97
      %p109 = scmp.eq.s32.totalorder %s38, 4
      %p110 = por %p108, %p109
      %p112 = scmp.ne.s32.totalorder %s97, %s111
      %p113 = scmp.eq.s32.totalorder %s38, 0
      %p114 = por %p112, %p113
      %s116 = sadd.s32 %s115, 1
      %p119 = scmp.eq.s32.totalorder %s32, 4
      %p120 = scmp.ne.s32.totalorder %s115, %s117
      %p121 = scmp.eq.s32.totalorder %s32, 0
      %p122 = por %p120, %p121
      %p123 = scmp.ne.s32.totalorder %s115, %s117
      %p124 = scmp.eq.s32.totalorder %s37, 4
      %p125 = por %p123, %p124
      %p126 = scmp.ne.s32.totalorder %s117, %s118
      %p127 = scmp.eq.s32.totalorder %s37, 0
      %p128 = por %p126, %p127
      %p129 = scmp.ne.s32.totalorder %s117, %s118
      %p130 = scmp.eq.s32.totalorder %s38, 4
      %p131 = por %p129, %p130
      %p133 = scmp.ne.s32.totalorder %s118, %s132
      %p134 = scmp.eq.s32.totalorder %s38, 0
      %p135 = por %p133, %p134
      %s137 = sadd.s32 %s136, 1
      %p140 = scmp.eq.s32.totalorder %s32, 4
      %p141 = scmp.ne.s32.totalorder %s136, %s138
      %p142 = scmp.eq.s32.totalorder %s32, 0
      %p143 = por %p141, %p142
      %p144 = scmp.ne.s32.totalorder %s136, %s138
      %p145 = scmp.eq.s32.totalorder %s37, 4
      %p146 = por %p144, %p145
      %p147 = scmp.ne.s32.totalorder %s138, %s139
      %p148 = scmp.eq.s32.totalorder %s37, 0
      %p149 = por %p147, %p148
      %p150 = scmp.ne.s32.totalorder %s138, %s139
      %p151 = scmp.eq.s32.totalorder %s38, 4
      %p152 = por %p150, %p151
      %p154 = scmp.ne.s32.totalorder %s139, %s153
      %p155 = scmp.eq.s32.totalorder %s38, 0
      %p156 = por %p154, %p155
      %s158 = sadd.s32 %s157, 1
      %p161 = scmp.eq.s32.totalorder %s32, 4
      %p162 = scmp.ne.s32.totalorder %s157, %s159
      %p163 = scmp.eq.s32.totalorder %s32, 0
      %p164 = por %p162, %p163
      %p165 = scmp.ne.s32.totalorder %s157, %s159
      %p166 = scmp.eq.s32.totalorder %s37, 4
      %p167 = por %p165, %p166
      %p168 = scmp.ne.s32.totalorder %s159, %s160
      %p169 = scmp.eq.s32.totalorder %s37, 0
      %p170 = por %p168, %p169
      %p171 = scmp.ne.s32.totalorder %s159, %s160
      %p172 = scmp.eq.s32.totalorder %s38, 4
      %p173 = por %p171, %p172
      %p175 = scmp.ne.s32.totalorder %s160, %s174
      %p176 = scmp.eq.s32.totalorder %s38, 0
      %p177 = por %p175, %p176
      %s179 = sadd.s32 %s178, 1
      %p182 = scmp.eq.s32.totalorder %s32, 4
      %p183 = scmp.ne.s32.totalorder %s178, %s180
      %p184 = scmp.eq.s32.totalorder %s32, 0
      %p185 = por %p183, %p184
      %p186 = scmp.ne.s32.totalorder %s178, %s180
      %p187 = scmp.eq.s32.totalorder %s37, 4
      %p188 = por %p186, %p187
      %p189 = scmp.ne.s32.totalorder %s180, %s181
      %p190 = scmp.eq.s32.totalorder %s37, 0
      %p191 = por %p189, %p190
      %p192 = scmp.ne.s32.totalorder %s180, %s181
      %p193 = scmp.eq.s32.totalorder %s38, 4
      %p194 = por %p192, %p193
      %p196 = scmp.ne.s32.totalorder %s181, %s195
      %p197 = scmp.eq.s32.totalorder %s38, 0
      %p198 = por %p196, %p197
      %s200 = sadd.s32 %s199, 1
      %p203 = scmp.eq.s32.totalorder %s32, 4
      %p204 = scmp.ne.s32.totalorder %s199, %s201
      %p205 = scmp.eq.s32.totalorder %s32, 0
      %p206 = por %p204, %p205
      %p207 = scmp.ne.s32.totalorder %s199, %s201
      %p208 = scmp.eq.s32.totalorder %s37, 4
      %p209 = por %p207, %p208
      %p210 = scmp.ne.s32.totalorder %s201, %s202
      %p211 = scmp.eq.s32.totalorder %s37, 0
      %p212 = por %p210, %p211
      %p213 = scmp.ne.s32.totalorder %s201, %s202
      %p214 = scmp.eq.s32.totalorder %s38, 4
      %p215 = por %p213, %p214
      %p217 = scmp.ne.s32.totalorder %s202, %s216
      %p218 = scmp.eq.s32.totalorder %s38, 0
      %p219 = por %p217, %p218
      %s221 = sadd.s32 %s220, 1
      %p224 = scmp.eq.s32.totalorder %s32, 4
      %p225 = scmp.ne.s32.totalorder %s220, %s222
      %p226 = scmp.eq.s32.totalorder %s32, 0
      %p227 = por %p225, %p226
      %p228 = scmp.ne.s32.totalorder %s220, %s222
      %p229 = scmp.eq.s32.totalorder %s37, 4
      %p230 = por %p228, %p229
      %p231 = scmp.ne.s32.totalorder %s222, %s223
      %p232 = scmp.eq.s32.totalorder %s37, 0
      %p233 = por %p231, %p232
      %p234 = scmp.ne.s32.totalorder %s222, %s223
      %p235 = scmp.eq.s32.totalorder %s38, 4
      %p236 = por %p234, %p235
      %p238 = scmp.ne.s32.totalorder %s223, %s237
      %p239 = scmp.eq.s32.totalorder %s38, 0
      %p240 = por %p238, %p239
      %s242 = sadd.s32 %s241, 1
      %p245 = scmp.eq.s32.totalorder %s32, 4
      %p246 = scmp.ne.s32.totalorder %s241, %s243
      %p247 = scmp.eq.s32.totalorder %s32, 0
      %p248 = por %p246, %p247
      %p249 = scmp.ne.s32.totalorder %s241, %s243
      %p250 = scmp.eq.s32.totalorder %s37, 4
      %p251 = por %p249, %p250
      %p252 = scmp.ne.s32.totalorder %s243, %s244
      %p253 = scmp.eq.s32.totalorder %s37, 0
      %p254 = por %p252, %p253
      %p255 = scmp.ne.s32.totalorder %s243, %s244
      %p256 = scmp.eq.s32.totalorder %s38, 4
      %p257 = por %p255, %p256
      %p259 = scmp.ne.s32.totalorder %s244, %s258
      %p260 = scmp.eq.s32.totalorder %s38, 0
      %p261 = por %p259, %p260
      %s263 = sadd.s32 %s262, 1
      %p266 = scmp.eq.s32.totalorder %s32, 4
      %p267 = scmp.ne.s32.totalorder %s262, %s264
      %p268 = scmp.eq.s32.totalorder %s32, 0
      %p269 = por %p267, %p268
      %p270 = scmp.ne.s32.totalorder %s262, %s264
      %p271 = scmp.eq.s32.totalorder %s37, 4
      %p272 = por %p270, %p271
      %p273 = scmp.ne.s32.totalorder %s264, %s265
      %p274 = scmp.eq.s32.totalorder %s37, 0
      %p275 = por %p273, %p274
      %p276 = scmp.ne.s32.totalorder %s264, %s265
      %p277 = scmp.eq.s32.totalorder %s38, 4
      %p278 = por %p276, %p277
      %p280 = scmp.ne.s32.totalorder %s265, %s279
      %p281 = scmp.eq.s32.totalorder %s38, 0
      %p282 = por %p280, %p281
      %s284 = sadd.s32 %s283, 1
      %p287 = scmp.eq.s32.totalorder %s32, 4
      %p288 = scmp.ne.s32.totalorder %s283, %s285
      %p289 = scmp.eq.s32.totalorder %s32, 0
      %p290 = por %p288, %p289
      %p291 = scmp.ne.s32.totalorder %s283, %s285
      %p292 = scmp.eq.s32.totalorder %s37, 4
      %p293 = por %p291, %p292
      %p294 = scmp.ne.s32.totalorder %s285, %s286
      %p295 = scmp.eq.s32.totalorder %s37, 0
      %p296 = por %p294, %p295
      %p297 = scmp.ne.s32.totalorder %s285, %s286
      %p298 = scmp.eq.s32.totalorder %s38, 4
      %p299 = por %p297, %p298
      %p301 = scmp.ne.s32.totalorder %s286, %s300
      %p302 = scmp.eq.s32.totalorder %s38, 0
      %p303 = por %p301, %p302
      %s305 = sadd.s32 %s304, 1
      %p308 = scmp.eq.s32.totalorder %s32, 4
      %p309 = scmp.ne.s32.totalorder %s304, %s306
      %p310 = scmp.eq.s32.totalorder %s32, 0
      %p311 = por %p309, %p310
      %p312 = scmp.ne.s32.totalorder %s304, %s306
      %p313 = scmp.eq.s32.totalorder %s37, 4
      %p314 = por %p312, %p313
      %p315 = scmp.ne.s32.totalorder %s306, %s307
      %p316 = scmp.eq.s32.totalorder %s37, 0
      %p317 = por %p315, %p316
      %p318 = scmp.ne.s32.totalorder %s306, %s307
      %p319 = scmp.eq.s32.totalorder %s38, 4
      %p320 = por %p318, %p319
      %p322 = scmp.ne.s32.totalorder %s307, %s321
      %p323 = scmp.eq.s32.totalorder %s38, 0
      %p324 = por %p322, %p323
      %s326 = sadd.s32 %s325, 1
      %p329 = scmp.eq.s32.totalorder %s32, 4
      %p330 = scmp.ne.s32.totalorder %s325, %s327
      %p331 = scmp.eq.s32.totalorder %s32, 0
      %p332 = por %p330, %p331
      %p333 = scmp.ne.s32.totalorder %s325, %s327
      %p334 = scmp.eq.s32.totalorder %s37, 4
      %p335 = por %p333, %p334
      %p336 = scmp.ne.s32.totalorder %s327, %s328
      %p337 = scmp.eq.s32.totalorder %s37, 0
      %p338 = por %p336, %p337
      %p339 = scmp.ne.s32.totalorder %s327, %s328
      %p340 = scmp.eq.s32.totalorder %s38, 4
      %p341 = por %p339, %p340
      %p343 = scmp.ne.s32.totalorder %s328, %s342
      %p344 = scmp.eq.s32.totalorder %s38, 0
      %p345 = por %p343, %p344
      %s347 = sadd.s32 %s346, 1
      %p350 = scmp.eq.s32.totalorder %s32, 4
      %p351 = scmp.ne.s32.totalorder %s346, %s348
      %p352 = scmp.eq.s32.totalorder %s32, 0
      %p353 = por %p351, %p352
      %p354 = scmp.ne.s32.totalorder %s346, %s348
      %p355 = scmp.eq.s32.totalorder %s37, 4
      %p356 = por %p354, %p355
      %p357 = scmp.ne.s32.totalorder %s348, %s349
      %p358 = scmp.eq.s32.totalorder %s37, 0
      %p359 = por %p357, %p358
      %p360 = scmp.ne.s32.totalorder %s348, %s349
      %p361 = scmp.eq.s32.totalorder %s38, 4
      %p362 = por %p360, %p361
      %p364 = scmp.ne.s32.totalorder %s349, %s363
      %p365 = scmp.eq.s32.totalorder %s38, 0
      %p366 = por %p364, %p365
      %s368 = sadd.s32 %s367, 1
      %p371 = scmp.eq.s32.totalorder %s32, 4
      %p372 = scmp.ne.s32.totalorder %s367, %s369
      %p373 = scmp.eq.s32.totalorder %s32, 0
      %p374 = por %p372, %p373
      %p375 = scmp.ne.s32.totalorder %s367, %s369
      %p376 = scmp.eq.s32.totalorder %s37, 4
      %p377 = por %p375, %p376
      %p378 = scmp.ne.s32.totalorder %s369, %s370
      %p379 = scmp.eq.s32.totalorder %s37, 0
      %p380 = por %p378, %p379
      %p381 = scmp.ne.s32.totalorder %s369, %s370
      %p382 = scmp.eq.s32.totalorder %s38, 4
      %p383 = por %p381, %p382
      %p385 = scmp.ne.s32.totalorder %s370, %s384
      %p386 = scmp.eq.s32.totalorder %s38, 0
      %p387 = por %p385, %p386
      %s389 = sadd.s32 %s388, 1
      %p392 = scmp.eq.s32.totalorder %s32, 4
      %p393 = scmp.ne.s32.totalorder %s388, %s390
      %p394 = scmp.eq.s32.totalorder %s32, 0
      %p395 = por %p393, %p394
      %p396 = scmp.ne.s32.totalorder %s388, %s390
      %p397 = scmp.eq.s32.totalorder %s37, 4
      %p398 = por %p396, %p397
      %p399 = scmp.ne.s32.totalorder %s390, %s391
      %p400 = scmp.eq.s32.totalorder %s37, 0
      %p401 = por %p399, %p400
      %p402 = scmp.ne.s32.totalorder %s390, %s391
      %p403 = scmp.eq.s32.totalorder %s38, 4
      %p404 = por %p402, %p403
      %p406 = scmp.ne.s32.totalorder %s391, %s405
      %p407 = scmp.eq.s32.totalorder %s38, 0
      %p408 = por %p406, %p407
      %p409 = scmp.le.s32.totalorder 1, %s32
      %p410 = scmp.lt.s32.totalorder %s32, 6
      %p411 = pnand %p409, %p410
      %p412 = pneg %p411
      // Predicated region
      $region9: #{ka4ganc_forward.1} parent=5 // pred_check
        _
      $region10: #{ka4ganc_forward.1} parent=5 // pred_check_branch
        %414 = sbr.rel (%p411) target = $region12
      $region11: #{ka4ganc_forward.1} parent=5 // pred_region
        %s415 = ssub.s32 %s32, 1
        // Predicated region
        $region13: #{ka4ganc_forward.1} parent=11 // pred_check
          %p416 = pneg %p65
        $region14: #{ka4ganc_forward.1} parent=11 // pred_check_branch
          %418 = sbr.rel (%p416) target = $region16
        $region15: #{ka4ganc_forward.1} parent=11 // pred_region
          _
        $region16: #{ka4ganc_forward.1} parent=11 // pred_fallthru
          _
        // Predicated region
        $region17: #{ka4ganc_forward.1} parent=11 // pred_check
          %p419 = pneg %p86
        $region18: #{ka4ganc_forward.1} parent=11 // pred_check_branch
          %421 = sbr.rel (%p419) target = $region20
        $region19: #{ka4ganc_forward.1} parent=11 // pred_region
          _
        $region20: #{ka4ganc_forward.1} parent=11 // pred_fallthru
          _
        // Predicated region
        $region21: #{ka4ganc_forward.1} parent=11 // pred_check
          %p422 = pneg %p107
        $region22: #{ka4ganc_forward.1} parent=11 // pred_check_branch
          %424 = sbr.rel (%p422) target = $region24
        $region23: #{ka4ganc_forward.1} parent=11 // pred_region
          _
        $region24: #{ka4ganc_forward.1} parent=11 // pred_fallthru
          _
        // Predicated region
        $region25: #{ka4ganc_forward.1} parent=11 // pred_check
          %p425 = pneg %p128
        $region26: #{ka4ganc_forward.1} parent=11 // pred_check_branch
          %427 = sbr.rel (%p425) target = $region28
        $region27: #{ka4ganc_forward.1} parent=11 // pred_region
          _
        $region28: #{ka4ganc_forward.1} parent=11 // pred_fallthru
          _
        // Predicated region
        $region29: #{ka4ganc_forward.1} parent=11 // pred_check
          %p428 = pneg %p149
        $region30: #{ka4ganc_forward.1} parent=11 // pred_check_branch
          %430 = sbr.rel (%p428) target = $region32
        $region31: #{ka4ganc_forward.1} parent=11 // pred_region
          _
        $region32: #{ka4ganc_forward.1} parent=11 // pred_fallthru
          _
        // Predicated region
        $region33: #{ka4ganc_forward.1} parent=11 // pred_check
          %p431 = pneg %p170
        $region34: #{ka4ganc_forward.1} parent=11 // pred_check_branch
          %433 = sbr.rel (%p431) target = $region36
        $region35: #{ka4ganc_forward.1} parent=11 // pred_region
          _
        $region36: #{ka4ganc_forward.1} parent=11 // pred_fallthru
          _
        // Predicated region
        $region37: #{ka4ganc_forward.1} parent=11 // pred_check
          %p434 = pneg %p191
        $region38: #{ka4ganc_forward.1} parent=11 // pred_check_branch
          %436 = sbr.rel (%p434) target = $region40
        $region39: #{ka4ganc_forward.1} parent=11 // pred_region
          _
        $region40: #{ka4ganc_forward.1} parent=11 // pred_fallthru
          _
        // Predicated region
        $region41: #{ka4ganc_forward.1} parent=11 // pred_check
          %p437 = pneg %p212
        $region42: #{ka4ganc_forward.1} parent=11 // pred_check_branch
          %439 = sbr.rel (%p437) target = $region44
        $region43: #{ka4ganc_forward.1} parent=11 // pred_region
          _
        $region44: #{ka4ganc_forward.1} parent=11 // pred_fallthru
          _
        // Predicated region
        $region45: #{ka4ganc_forward.1} parent=11 // pred_check
          %p440 = pneg %p233
        $region46: #{ka4ganc_forward.1} parent=11 // pred_check_branch
          %442 = sbr.rel (%p440) target = $region48
        $region47: #{ka4ganc_forward.1} parent=11 // pred_region
          _
        $region48: #{ka4ganc_forward.1} parent=11 // pred_fallthru
          _
        // Predicated region
        $region49: #{ka4ganc_forward.1} parent=11 // pred_check
          %p443 = pneg %p254
        $region50: #{ka4ganc_forward.1} parent=11 // pred_check_branch
          %445 = sbr.rel (%p443) target = $region52
        $region51: #{ka4ganc_forward.1} parent=11 // pred_region
          _
        $region52: #{ka4ganc_forward.1} parent=11 // pred_fallthru
          _
        // Predicated region
        $region53: #{ka4ganc_forward.1} parent=11 // pred_check
          %p446 = pneg %p275
        $region54: #{ka4ganc_forward.1} parent=11 // pred_check_branch
          %448 = sbr.rel (%p446) target = $region56
        $region55: #{ka4ganc_forward.1} parent=11 // pred_region
          _
        $region56: #{ka4ganc_forward.1} parent=11 // pred_fallthru
          _
        // Predicated region
        $region57: #{ka4ganc_forward.1} parent=11 // pred_check
          %p449 = pneg %p296
        $region58: #{ka4ganc_forward.1} parent=11 // pred_check_branch
          %451 = sbr.rel (%p449) target = $region60
        $region59: #{ka4ganc_forward.1} parent=11 // pred_region
          _
        $region60: #{ka4ganc_forward.1} parent=11 // pred_fallthru
          _
        // Predicated region
        $region61: #{ka4ganc_forward.1} parent=11 // pred_check
          %p452 = pneg %p317
        $region62: #{ka4ganc_forward.1} parent=11 // pred_check_branch
          %454 = sbr.rel (%p452) target = $region64
        $region63: #{ka4ganc_forward.1} parent=11 // pred_region
          _
        $region64: #{ka4ganc_forward.1} parent=11 // pred_fallthru
          _
        // Predicated region
        $region65: #{ka4ganc_forward.1} parent=11 // pred_check
          %p455 = pneg %p338
        $region66: #{ka4ganc_forward.1} parent=11 // pred_check_branch
          %457 = sbr.rel (%p455) target = $region68
        $region67: #{ka4ganc_forward.1} parent=11 // pred_region
          _
        $region68: #{ka4ganc_forward.1} parent=11 // pred_fallthru
          _
      $region12: #{ka4ganc_forward.1} parent=5 // pred_fallthru
        _
      %p458 = scmp.lt.s32.totalorder %s32, 5
      // Predicated region
      $region69: #{ka4ganc_forward.1} parent=5 // pred_check
        %p459 = pneg %p458
      $region70: #{ka4ganc_forward.1} parent=5 // pred_check_branch
        %461 = sbr.rel (%p459) target = $region72
      $region71: #{ka4ganc_forward.1} parent=5 // pred_region
        _
      $region72: #{ka4ganc_forward.1} parent=5 // pred_fallthru
        _
      %p462 = scmp.le.s32.totalorder 1, %s32
      %p463 = scmp.lt.s32.totalorder %s32, 6
      %p464 = pnand %p462, %p463
      %p465 = pneg %p464
      // Predicated region
      $region73: #{ka4ganc_forward.1} parent=5 // pred_check
        _
      $region74: #{ka4ganc_forward.1} parent=5 // pred_check_branch
        %467 = sbr.rel (%p464) target = $region76
      $region75: #{ka4ganc_forward.1} parent=5 // pred_region
        %s468 = ssub.s32 %s32, 1
        %p469 = pneg %p65
        %p470 = pneg %p62
        %p471 = pneg %p86
        %p472 = pneg %p83
        %p473 = pneg %p107
        %p474 = pneg %p104
        %p475 = pneg %p128
        %p476 = pneg %p125
        %p477 = pneg %p149
        %p478 = pneg %p146
        %p479 = pneg %p170
        %p480 = pneg %p167
        %p481 = pneg %p191
        %p482 = pneg %p188
        %p483 = pneg %p212
        %p484 = pneg %p209
        %p485 = pneg %p233
        %p486 = pneg %p230
        %p487 = pneg %p254
        %p488 = pneg %p251
        %p489 = pneg %p275
        %p490 = pneg %p272
        %p491 = pneg %p296
        %p492 = pneg %p293
        %p493 = pneg %p317
        %p494 = pneg %p314
        %p495 = pneg %p338
        %p496 = pneg %p335
        %p497 = pneg %p359
        %p498 = pneg %p356
        %p499 = pneg %p380
        %p500 = pneg %p377
        %p501 = pneg %p401
        %p502 = pneg %p398
        %s504 = smul.u32 %s42, 16
        %p505 = scmp.eq.s32.totalorder %s41, 0
        // Predicated region
        $region77: #{ka4ganc_forward.1} parent=75 // pred_check
          %p506 = pneg %p505
        $region78: #{ka4ganc_forward.1} parent=75 // pred_check_branch
          %508 = sbr.rel (%p506) target = $region80
        $region79: #{ka4ganc_forward.1} parent=75 // pred_region
          %s509 = sshra.s32 %s504, 3
          %s510 = sand.u32 %s504, 7
          %s511 = smul.addr %s509, 4
          %s512 = scalar_lea.vmem %s2, %s511
          %v513 = vld [vmem:[%s512] sm:$0xf]
          %v514 = vld [vmem:[%s512 + $0x4] sm:$0xf]
          %v515 = vld [vmem:[%s3] sm:$0xf]
          %v516 = vld [vmem:[%s3 + $0x4] sm:$0xf]
          %v517 = vld [vmem:[%s3 + $0x8] sm:$0xf]
          %v518 = vld [vmem:[%s3 + $0xc] sm:$0xf]
          %v519 = vld [vmem:[%s3 + $0x10] sm:$0xf]
          %v520 = vld [vmem:[%s3 + $0x14] sm:$0xf]
          %v521 = vld [vmem:[%s3 + $0x18] sm:$0xf]
          %v522 = vld [vmem:[%s3 + $0x1c] sm:$0xf]
          %v523 = vld [vmem:[%s3 + $0x20] sm:$0xf]
          %v524 = vld [vmem:[%s3 + $0x24] sm:$0xf]
          %v525 = vld [vmem:[%s3 + $0x28] sm:$0xf]
          %v526 = vld [vmem:[%s3 + $0x2c] sm:$0xf]
          %v527 = vld [vmem:[%s3 + $0x30] sm:$0xf]
          %v528 = vld [vmem:[%s3 + $0x34] sm:$0xf]
          %v529 = vld [vmem:[%s3 + $0x38] sm:$0xf]
          %v530 = vld [vmem:[%s3 + $0x3c] sm:$0xf]
          %v533 = vunpack.c.l.b16 %v513
          %v534 = vunpack.c.l.b16 %v514
          %v535 = vpack.c.b16 %v534, %v533
          %v553 = vunpack.c.l.b16 %v515
          %v554 = vunpack.c.l.b16 %v516
          %v555 = vunpack.c.l.b16 %v517
          %v556 = vunpack.c.l.b16 %v518
          %v557 = vunpack.c.l.b16 %v519
          %v558 = vunpack.c.l.b16 %v520
          %v559 = vunpack.c.l.b16 %v521
          %v560 = vunpack.c.l.b16 %v522
          %v561 = vunpack.c.l.b16 %v523
          %v562 = vunpack.c.l.b16 %v524
          %v563 = vunpack.c.l.b16 %v525
          %v564 = vunpack.c.l.b16 %v526
          %v565 = vunpack.c.l.b16 %v527
          %v566 = vunpack.c.l.b16 %v528
          %v567 = vunpack.c.l.b16 %v529
          %v568 = vunpack.c.l.b16 %v530
          %v569 = vpack.c.b16 %v554, %v553
          %v570 = vpack.c.b16 %v556, %v555
          %v571 = vpack.c.b16 %v558, %v557
          %v572 = vpack.c.b16 %v560, %v559
          %v573 = vpack.c.b16 %v562, %v561
          %v574 = vpack.c.b16 %v564, %v563
          %v575 = vpack.c.b16 %v566, %v565
          %v576 = vpack.c.b16 %v568, %v567
          %585 = vmatprep.subr.bf16.mxu0 0
          %586 = vmatpush1.bf16.msra.mxu0 %v569
          %587 = vmatprep.subr.bf16.mxu0 0
          %588 = vmatpush1.bf16.msra.mxu0 %v570
          %589 = vmatprep.subr.bf16.mxu0 0
          %590 = vmatpush1.bf16.msra.mxu0 %v571
          %591 = vmatprep.subr.bf16.mxu0 0
          %592 = vmatpush1.bf16.msra.mxu0 %v572
          %593 = vmatprep.subr.bf16.mxu0 0
          %594 = vmatpush1.bf16.msra.mxu0 %v573
          %595 = vmatprep.subr.bf16.mxu0 0
          %596 = vmatpush1.bf16.msra.mxu0 %v574
          %597 = vmatprep.subr.bf16.mxu0 0
          %598 = vmatpush1.bf16.msra.mxu0 %v575
          %599 = vmatprep.subr.bf16.mxu0 0
          %600 = vmatpush1.bf16.msra.mxu0 %v576
          %601 = vmatprep.subr.bf16.mxu0 0
          %602 = vmatpush1.bf16.msra.mxu0 0
          %603 = vmatprep.subr.bf16.mxu0 0
          %604 = vmatpush1.bf16.msra.mxu0 0
          %605 = vmatprep.subr.bf16.mxu0 0
          %606 = vmatpush1.bf16.msra.mxu0 0
          %607 = vmatprep.subr.bf16.mxu0 0
          %608 = vmatpush1.bf16.msra.mxu0 0
          %609 = vmatprep.subr.bf16.mxu0 0
          %610 = vmatpush1.bf16.msra.mxu0 0
          %611 = vmatprep.subr.bf16.mxu0 0
          %612 = vmatpush1.bf16.msra.mxu0 0
          %613 = vmatprep.subr.bf16.mxu0 0
          %614 = vmatpush1.bf16.msra.mxu0 0
          %615 = vmatprep.subr.bf16.mxu0 0
          %616 = vmatpush1.bf16.msra.mxu0 0
          %617 = vmatprep.mubr.bf16.mxu0 0
          %618 = vmatmul.mubr.bf16.gmra.mrb[0].mxu0 %v535
          %v619 = vpop.f32.mrb[0].mxu0
          %v620 = vadd.f32 0.0, %v619
          %v621 = vpop.f32.mrb[0].mxu0
          %v622 = vpop.f32.mrb[0].mxu0
          %v623 = vadd.f32 0.0, %v622
          %v624 = vpop.f32.mrb[0].mxu0
          %625 = vdwg.mxu0
          %v626 = vpack.c.bf16 %v623, %v620
          %s627 = sshra.s32 %s504, 4
          %s628 = sand.u32 %s504, 15
          %s629 = smul.addr %s627, 8
          %s630 = scalar_lea.vmem [#allocation2], %s629
          %631 = vst [vmem:[%s630] sm:$0xff] %v626
        $region80: #{ka4ganc_forward.1} parent=75 // pred_fallthru
          _
        %p632 = scmp.eq.s32.totalorder %s41, 1
        // Predicated region
        $region81: #{ka4ganc_forward.1} parent=75 // pred_check
          %p633 = pneg %p632
        $region82: #{ka4ganc_forward.1} parent=75 // pred_check_branch
          %635 = sbr.rel (%p633) target = $region84
        $region83: #{ka4ganc_forward.1} parent=75 // pred_region
          %v636 = vld [vmem:[%s1] sm:$0xf]
          %v637 = vld [vmem:[%s1 + $0x4] sm:$0xf]
          %v638 = vld [vmem:[#allocation2] sm:$0xff]
          %v641 = vunpack.c.l.b16 %v636
          %v642 = vunpack.c.l.b16 %v637
          %v643 = vpack.c.b16 %v642, %v641
          %vm644 = vcmask 130048
          %v646 = vsel %vm644, %v643, 0
          %648 = vmatprep.subr.bf16.mxu0 0
          %649 = vmatpush1.bf16.msra.mxu0 %v638
          %650 = vmatprep.subr.bf16.mxu0 0
          %651 = vmatpush1.bf16.msra.mxu0 0
          %652 = vmatprep.subr.bf16.mxu0 0
          %653 = vmatpush1.bf16.msra.mxu0 0
          %654 = vmatprep.subr.bf16.mxu0 0
          %655 = vmatpush1.bf16.msra.mxu0 0
          %656 = vmatprep.subr.bf16.mxu0 0
          %657 = vmatpush1.bf16.msra.mxu0 0
          %658 = vmatprep.subr.bf16.mxu0 0
          %659 = vmatpush1.bf16.msra.mxu0 0
          %660 = vmatprep.subr.bf16.mxu0 0
          %661 = vmatpush1.bf16.msra.mxu0 0
          %662 = vmatprep.subr.bf16.mxu0 0
          %663 = vmatpush1.bf16.msra.mxu0 0
          %664 = vmatprep.subr.bf16.mxu0 0
          %665 = vmatpush1.bf16.msra.mxu0 0
          %666 = vmatprep.subr.bf16.mxu0 0
          %667 = vmatpush1.bf16.msra.mxu0 0
          %668 = vmatprep.subr.bf16.mxu0 0
          %669 = vmatpush1.bf16.msra.mxu0 0
          %670 = vmatprep.subr.bf16.mxu0 0
          %671 = vmatpush1.bf16.msra.mxu0 0
          %672 = vmatprep.subr.bf16.mxu0 0
          %673 = vmatpush1.bf16.msra.mxu0 0
          %674 = vmatprep.subr.bf16.mxu0 0
          %675 = vmatpush1.bf16.msra.mxu0 0
          %676 = vmatprep.subr.bf16.mxu0 0
          %677 = vmatpush1.bf16.msra.mxu0 0
          %678 = vmatprep.subr.bf16.mxu0 0
          %679 = vmatpush1.bf16.msra.mxu0 0
          %680 = vmatprep.mubr.bf16.mxu0 0
          %681 = vmatmul.mubr.bf16.gmra.mrb[0].mxu0 %v646
          %v682 = vpop.f32.mrb[0].mxu0
          %v683 = vadd.f32 0.0, %v682
          %v684 = vpop.f32.mrb[0].mxu0
          %v685 = vpop.f32.mrb[0].mxu0
          %v686 = vadd.f32 0.0, %v685
          %v687 = vpop.f32.mrb[0].mxu0
          %688 = vdwg.mxu0
          %vm689 = vcmp.ge.f32.partialorder %v683, 0.0
          %vm690 = vcmp.ge.f32.partialorder %v686, 0.0
          %v691 = vmul.f32 %v683, 0.01
          %v692 = vmul.f32 %v686, 0.01
          %v693 = vsel %vm689, %v683, %v691
          %v694 = vsel %vm690, %v686, %v692
          %v695 = vpack.c.bf16 %v694, %v693
          %v696 = vld [vmem:[%s4] sm:$0xf]
          %v697 = vld [vmem:[%s4 + $0x4] sm:$0xf]
          %v698 = vld [vmem:[%s4 + $0x8] sm:$0xf]
          %v699 = vld [vmem:[%s4 + $0xc] sm:$0xf]
          %v700 = vld [vmem:[%s4 + $0x10] sm:$0xf]
          %v701 = vld [vmem:[%s4 + $0x14] sm:$0xf]
          %v702 = vld [vmem:[%s4 + $0x18] sm:$0xf]
          %v703 = vld [vmem:[%s4 + $0x1c] sm:$0xf]
          %v704 = vld [vmem:[%s4 + $0x20] sm:$0xf]
          %v705 = vld [vmem:[%s4 + $0x24] sm:$0xf]
          %v706 = vld [vmem:[%s4 + $0x28] sm:$0xf]
          %v707 = vld [vmem:[%s4 + $0x2c] sm:$0xf]
          %v708 = vld [vmem:[%s4 + $0x30] sm:$0xf]
          %v709 = vld [vmem:[%s4 + $0x34] sm:$0xf]
          %v710 = vld [vmem:[%s4 + $0x38] sm:$0xf]
          %v711 = vld [vmem:[%s4 + $0x3c] sm:$0xf]
          %v728 = vunpack.c.l.b16 %v696
          %v729 = vunpack.c.l.b16 %v697
          %v730 = vunpack.c.l.b16 %v698
          %v731 = vunpack.c.l.b16 %v699
          %v732 = vunpack.c.l.b16 %v700
          %v733 = vunpack.c.l.b16 %v701
          %v734 = vunpack.c.l.b16 %v702
          %v735 = vunpack.c.l.b16 %v703
          %v736 = vunpack.c.l.b16 %v704
          %v737 = vunpack.c.l.b16 %v705
          %v738 = vunpack.c.l.b16 %v706
          %v739 = vunpack.c.l.b16 %v707
          %v740 = vunpack.c.l.b16 %v708
          %v741 = vunpack.c.l.b16 %v709
          %v742 = vunpack.c.l.b16 %v710
          %v743 = vunpack.c.l.b16 %v711
          %v744 = vpack.c.b16 %v729, %v728
          %v745 = vpack.c.b16 %v731, %v730
          %v746 = vpack.c.b16 %v733, %v732
          %v747 = vpack.c.b16 %v735, %v734
          %v748 = vpack.c.b16 %v737, %v736
          %v749 = vpack.c.b16 %v739, %v738
          %v750 = vpack.c.b16 %v741, %v740
          %v751 = vpack.c.b16 %v743, %v742
          %760 = vmatprep.subr.bf16.mxu0 0
          %761 = vmatpush1.bf16.msra.mxu0 %v744
          %762 = vmatprep.subr.bf16.mxu0 0
          %763 = vmatpush1.bf16.msra.mxu0 %v745
          %764 = vmatprep.subr.bf16.mxu0 0
          %765 = vmatpush1.bf16.msra.mxu0 %v746
          %766 = vmatprep.subr.bf16.mxu0 0
          %767 = vmatpush1.bf16.msra.mxu0 %v747
          %768 = vmatprep.subr.bf16.mxu0 0
          %769 = vmatpush1.bf16.msra.mxu0 %v748
          %770 = vmatprep.subr.bf16.mxu0 0
          %771 = vmatpush1.bf16.msra.mxu0 %v749
          %772 = vmatprep.subr.bf16.mxu0 0
          %773 = vmatpush1.bf16.msra.mxu0 %v750
          %774 = vmatprep.subr.bf16.mxu0 0
          %775 = vmatpush1.bf16.msra.mxu0 %v751
          %776 = vmatprep.subr.bf16.mxu0 0
          %777 = vmatpush1.bf16.msra.mxu0 0
          %778 = vmatprep.subr.bf16.mxu0 0
          %779 = vmatpush1.bf16.msra.mxu0 0
          %780 = vmatprep.subr.bf16.mxu0 0
          %781 = vmatpush1.bf16.msra.mxu0 0
          %782 = vmatprep.subr.bf16.mxu0 0
          %783 = vmatpush1.bf16.msra.mxu0 0
          %784 = vmatprep.subr.bf16.mxu0 0
          %785 = vmatpush1.bf16.msra.mxu0 0
          %786 = vmatprep.subr.bf16.mxu0 0
          %787 = vmatpush1.bf16.msra.mxu0 0
          %788 = vmatprep.subr.bf16.mxu0 0
          %789 = vmatpush1.bf16.msra.mxu0 0
          %790 = vmatprep.subr.bf16.mxu0 0
          %791 = vmatpush1.bf16.msra.mxu0 0
          %792 = vmatprep.mubr.bf16.mxu0 0
          %793 = vmatmul.mubr.bf16.gmra.mrb[0].mxu0 %v695
          %v794 = vpop.f32.mrb[0].mxu0
          %v795 = vadd.f32 0.0, %v794
          %v796 = vpop.f32.mrb[0].mxu0
          %v797 = vpop.f32.mrb[0].mxu0
          %v798 = vadd.f32 0.0, %v797
          %v799 = vpop.f32.mrb[0].mxu0
          %800 = vdwg.mxu0
          %v801 = vpack.c.bf16 %v798, %v795
          %s802 = sshra.s32 %s504, 4
          %s803 = sand.u32 %s504, 15
          %s804 = smul.addr %s802, 8
          %s805 = scalar_lea.vmem [#allocation3], %s804
          %806 = vst [vmem:[%s805] sm:$0xff] %v801
        $region84: #{ka4ganc_forward.1} parent=75 // pred_fallthru
          _
        %p807 = scmp.eq.s32.totalorder %s41, 2
        // Predicated region
        $region85: #{ka4ganc_forward.1} parent=75 // pred_check
          %p808 = pneg %p807
        $region86: #{ka4ganc_forward.1} parent=75 // pred_check_branch
          %810 = sbr.rel (%p808) target = $region88
        $region87: #{ka4ganc_forward.1} parent=75 // pred_region
          %v811 = vld [vmem:[%s1] sm:$0xf]
          %v812 = vld [vmem:[%s1 + $0x4] sm:$0xf]
          %v813 = vld [vmem:[#allocation3] sm:$0xff]
          %v816 = vunpack.c.l.b16 %v811
          %v817 = vunpack.c.l.b16 %v812
          %v818 = vpack.c.b16 %v817, %v816
          %vm819 = vcmask 130048
          %v821 = vsel %vm819, %v818, 0
          %823 = vmatprep.subr.bf16.mxu0 0
          %824 = vmatpush1.bf16.msra.mxu0 %v813
          %825 = vmatprep.subr.bf16.mxu0 0
          %826 = vmatpush1.bf16.msra.mxu0 0
          %827 = vmatprep.subr.bf16.mxu0 0
          %828 = vmatpush1.bf16.msra.mxu0 0
          %829 = vmatprep.subr.bf16.mxu0 0
          %830 = vmatpush1.bf16.msra.mxu0 0
          %831 = vmatprep.subr.bf16.mxu0 0
          %832 = vmatpush1.bf16.msra.mxu0 0
          %833 = vmatprep.subr.bf16.mxu0 0
          %834 = vmatpush1.bf16.msra.mxu0 0
          %835 = vmatprep.subr.bf16.mxu0 0
          %836 = vmatpush1.bf16.msra.mxu0 0
          %837 = vmatprep.subr.bf16.mxu0 0
          %838 = vmatpush1.bf16.msra.mxu0 0
          %839 = vmatprep.subr.bf16.mxu0 0
          %840 = vmatpush1.bf16.msra.mxu0 0
          %841 = vmatprep.subr.bf16.mxu0 0
          %842 = vmatpush1.bf16.msra.mxu0 0
          %843 = vmatprep.subr.bf16.mxu0 0
          %844 = vmatpush1.bf16.msra.mxu0 0
          %845 = vmatprep.subr.bf16.mxu0 0
          %846 = vmatpush1.bf16.msra.mxu0 0
          %847 = vmatprep.subr.bf16.mxu0 0
          %848 = vmatpush1.bf16.msra.mxu0 0
          %849 = vmatprep.subr.bf16.mxu0 0
          %850 = vmatpush1.bf16.msra.mxu0 0
          %851 = vmatprep.subr.bf16.mxu0 0
          %852 = vmatpush1.bf16.msra.mxu0 0
          %853 = vmatprep.subr.bf16.mxu0 0
          %854 = vmatpush1.bf16.msra.mxu0 0
          %855 = vmatprep.mubr.bf16.mxu0 0
          %856 = vmatmul.mubr.bf16.gmra.mrb[0].mxu0 %v821
          %v857 = vpop.f32.mrb[0].mxu0
          %v858 = vadd.f32 0.0, %v857
          %v859 = vpop.f32.mrb[0].mxu0
          %v860 = vpop.f32.mrb[0].mxu0
          %v861 = vadd.f32 0.0, %v860
          %v862 = vpop.f32.mrb[0].mxu0
          %863 = vdwg.mxu0
          %vm864 = vcmp.ge.f32.partialorder %v858, 0.0
          %vm865 = vcmp.ge.f32.partialorder %v861, 0.0
          %v866 = vmul.f32 %v858, 0.01
          %v867 = vmul.f32 %v861, 0.01
          %v868 = vsel %vm864, %v858, %v866
          %v869 = vsel %vm865, %v861, %v867
          %v870 = vpack.c.bf16 %v869, %v868
          %v871 = vld [vmem:[%s5] sm:$0xf]
          %v872 = vld [vmem:[%s5 + $0x4] sm:$0xf]
          %v873 = vld [vmem:[%s5 + $0x8] sm:$0xf]
          %v874 = vld [vmem:[%s5 + $0xc] sm:$0xf]
          %v875 = vld [vmem:[%s5 + $0x10] sm:$0xf]
          %v876 = vld [vmem:[%s5 + $0x14] sm:$0xf]
          %v877 = vld [vmem:[%s5 + $0x18] sm:$0xf]
          %v878 = vld [vmem:[%s5 + $0x1c] sm:$0xf]
          %v879 = vld [vmem:[%s5 + $0x20] sm:$0xf]
          %v880 = vld [vmem:[%s5 + $0x24] sm:$0xf]
          %v881 = vld [vmem:[%s5 + $0x28] sm:$0xf]
          %v882 = vld [vmem:[%s5 + $0x2c] sm:$0xf]
          %v883 = vld [vmem:[%s5 + $0x30] sm:$0xf]
          %v884 = vld [vmem:[%s5 + $0x34] sm:$0xf]
          %v885 = vld [vmem:[%s5 + $0x38] sm:$0xf]
          %v886 = vld [vmem:[%s5 + $0x3c] sm:$0xf]
          %v903 = vunpack.c.l.b16 %v871
          %v904 = vunpack.c.l.b16 %v872
          %v905 = vunpack.c.l.b16 %v873
          %v906 = vunpack.c.l.b16 %v874
          %v907 = vunpack.c.l.b16 %v875
          %v908 = vunpack.c.l.b16 %v876
          %v909 = vunpack.c.l.b16 %v877
          %v910 = vunpack.c.l.b16 %v878
          %v911 = vunpack.c.l.b16 %v879
          %v912 = vunpack.c.l.b16 %v880
          %v913 = vunpack.c.l.b16 %v881
          %v914 = vunpack.c.l.b16 %v882
          %v915 = vunpack.c.l.b16 %v883
          %v916 = vunpack.c.l.b16 %v884
          %v917 = vunpack.c.l.b16 %v885
          %v918 = vunpack.c.l.b16 %v886
          %v919 = vpack.c.b16 %v904, %v903
          %v920 = vpack.c.b16 %v906, %v905
          %v921 = vpack.c.b16 %v908, %v907
          %v922 = vpack.c.b16 %v910, %v909
          %v923 = vpack.c.b16 %v912, %v911
          %v924 = vpack.c.b16 %v914, %v913
          %v925 = vpack.c.b16 %v916, %v915
          %v926 = vpack.c.b16 %v918, %v917
          %935 = vmatprep.subr.bf16.mxu0 0
          %936 = vmatpush1.bf16.msra.mxu0 %v919
          %937 = vmatprep.subr.bf16.mxu0 0
          %938 = vmatpush1.bf16.msra.mxu0 %v920
          %939 = vmatprep.subr.bf16.mxu0 0
          %940 = vmatpush1.bf16.msra.mxu0 %v921
          %941 = vmatprep.subr.bf16.mxu0 0
          %942 = vmatpush1.bf16.msra.mxu0 %v922
          %943 = vmatprep.subr.bf16.mxu0 0
          %944 = vmatpush1.bf16.msra.mxu0 %v923
          %945 = vmatprep.subr.bf16.mxu0 0
          %946 = vmatpush1.bf16.msra.mxu0 %v924
          %947 = vmatprep.subr.bf16.mxu0 0
          %948 = vmatpush1.bf16.msra.mxu0 %v925
          %949 = vmatprep.subr.bf16.mxu0 0
          %950 = vmatpush1.bf16.msra.mxu0 %v926
          %951 = vmatprep.subr.bf16.mxu0 0
          %952 = vmatpush1.bf16.msra.mxu0 0
          %953 = vmatprep.subr.bf16.mxu0 0
          %954 = vmatpush1.bf16.msra.mxu0 0
          %955 = vmatprep.subr.bf16.mxu0 0
          %956 = vmatpush1.bf16.msra.mxu0 0
          %957 = vmatprep.subr.bf16.mxu0 0
          %958 = vmatpush1.bf16.msra.mxu0 0
          %959 = vmatprep.subr.bf16.mxu0 0
          %960 = vmatpush1.bf16.msra.mxu0 0
          %961 = vmatprep.subr.bf16.mxu0 0
          %962 = vmatpush1.bf16.msra.mxu0 0
          %963 = vmatprep.subr.bf16.mxu0 0
          %964 = vmatpush1.bf16.msra.mxu0 0
          %965 = vmatprep.subr.bf16.mxu0 0
          %966 = vmatpush1.bf16.msra.mxu0 0
          %967 = vmatprep.mubr.bf16.mxu0 0
          %968 = vmatmul.mubr.bf16.gmra.mrb[0].mxu0 %v870
          %v969 = vpop.f32.mrb[0].mxu0
          %v970 = vadd.f32 0.0, %v969
          %v971 = vpop.f32.mrb[0].mxu0
          %v972 = vpop.f32.mrb[0].mxu0
          %v973 = vadd.f32 0.0, %v972
          %v974 = vpop.f32.mrb[0].mxu0
          %975 = vdwg.mxu0
          %v976 = vpack.c.bf16 %v973, %v970
          %s977 = sshra.s32 %s504, 4
          %s978 = sand.u32 %s504, 15
          %s979 = smul.addr %s977, 8
          %s980 = scalar_lea.vmem [#allocation2], %s979
          %981 = vst [vmem:[%s980] sm:$0xff] %v976
        $region88: #{ka4ganc_forward.1} parent=75 // pred_fallthru
          _
        %p982 = scmp.eq.s32.totalorder %s41, 3
        // Predicated region
        $region89: #{ka4ganc_forward.1} parent=75 // pred_check
          %p983 = pneg %p982
        $region90: #{ka4ganc_forward.1} parent=75 // pred_check_branch
          %985 = sbr.rel (%p983) target = $region92
        $region91: #{ka4ganc_forward.1} parent=75 // pred_region
          %v986 = vld [vmem:[%s1] sm:$0xf]
          %v987 = vld [vmem:[%s1 + $0x4] sm:$0xf]
          %v988 = vld [vmem:[#allocation2] sm:$0xff]
          %v991 = vunpack.c.l.b16 %v986
          %v992 = vunpack.c.l.b16 %v987
          %v993 = vpack.c.b16 %v992, %v991
          %vm994 = vcmask 130048
          %v996 = vsel %vm994, %v993, 0
          %998 = vmatprep.subr.bf16.mxu0 0
          %999 = vmatpush1.bf16.msra.mxu0 %v988
          %1000 = vmatprep.subr.bf16.mxu0 0
          %1001 = vmatpush1.bf16.msra.mxu0 0
          %1002 = vmatprep.subr.bf16.mxu0 0
          %1003 = vmatpush1.bf16.msra.mxu0 0
          %1004 = vmatprep.subr.bf16.mxu0 0
          %1005 = vmatpush1.bf16.msra.mxu0 0
          %1006 = vmatprep.subr.bf16.mxu0 0
          %1007 = vmatpush1.bf16.msra.mxu0 0
          %1008 = vmatprep.subr.bf16.mxu0 0
          %1009 = vmatpush1.bf16.msra.mxu0 0
          %1010 = vmatprep.subr.bf16.mxu0 0
          %1011 = vmatpush1.bf16.msra.mxu0 0
          %1012 = vmatprep.subr.bf16.mxu0 0
          %1013 = vmatpush1.bf16.msra.mxu0 0
          %1014 = vmatprep.subr.bf16.mxu0 0
          %1015 = vmatpush1.bf16.msra.mxu0 0
          %1016 = vmatprep.subr.bf16.mxu0 0
          %1017 = vmatpush1.bf16.msra.mxu0 0
          %1018 = vmatprep.subr.bf16.mxu0 0
          %1019 = vmatpush1.bf16.msra.mxu0 0
          %1020 = vmatprep.subr.bf16.mxu0 0
          %1021 = vmatpush1.bf16.msra.mxu0 0
          %1022 = vmatprep.subr.bf16.mxu0 0
          %1023 = vmatpush1.bf16.msra.mxu0 0
          %1024 = vmatprep.subr.bf16.mxu0 0
          %1025 = vmatpush1.bf16.msra.mxu0 0
          %1026 = vmatprep.subr.bf16.mxu0 0
          %1027 = vmatpush1.bf16.msra.mxu0 0
          %1028 = vmatprep.subr.bf16.mxu0 0
          %1029 = vmatpush1.bf16.msra.mxu0 0
          %1030 = vmatprep.mubr.bf16.mxu0 0
          %1031 = vmatmul.mubr.bf16.gmra.mrb[0].mxu0 %v996
          %v1032 = vpop.f32.mrb[0].mxu0
          %v1033 = vadd.f32 0.0, %v1032
          %v1034 = vpop.f32.mrb[0].mxu0
          %v1035 = vpop.f32.mrb[0].mxu0
          %v1036 = vadd.f32 0.0, %v1035
          %v1037 = vpop.f32.mrb[0].mxu0
          %1038 = vdwg.mxu0
          %vm1039 = vcmp.ge.f32.partialorder %v1033, 0.0
          %vm1040 = vcmp.ge.f32.partialorder %v1036, 0.0
          %v1041 = vmul.f32 %v1033, 0.01
          %v1042 = vmul.f32 %v1036, 0.01
          %v1043 = vsel %vm1039, %v1033, %v1041
          %v1044 = vsel %vm1040, %v1036, %v1042
          %v1045 = vld [vmem:[%s6] sm:$0x1]
          %1047 = vset.pattern.permute.xlu0 0
          %1048 = vperm.xlu0 %1047, %v1043
          %v1049 = vpop.permute.xlu0 %1048
          %1052 = vset.pattern.permute.xlu0 0
          %1053 = vperm.xlu0 %1052, %v1044
          %v1054 = vpop.permute.xlu0 %1053
          %v1057 = vlaneseq
          %v1058 = vshrl.u32 %v1057, 7
          %v1059 = vsub.s32 0, %v1058
          %v1060 = vrot.slane %v1045, %v1059
          %v1062 = vmul.f32 %v1049, %v1060
          %v1063 = vmul.f32 %v1054, %v1060
          %v1064 = vld [vmem:[%s7] sm:$0x1]
          %v1066 = vlaneseq
          %v1067 = vshrl.u32 %v1066, 7
          %v1068 = vsub.s32 0, %v1067
          %v1069 = vrot.slane %v1064, %v1068
          %v1071 = vadd.f32 %v1062, %v1069
          %v1072 = vadd.f32 %v1063, %v1069
          %v1073 = vpack.c.bf16 %v1072, %v1071
          %s1074 = sshra.s32 %s504, 4
          %s1075 = sand.u32 %s504, 15
          %s1076 = smul.addr %s1074, 8
          %s1077 = scalar_lea.vmem [#allocation3], %s1076
          %1078 = vst [vmem:[%s1077] sm:$0xff] %v1073
        $region92: #{ka4ganc_forward.1} parent=75 // pred_fallthru
          _
        %p1079 = scmp.eq.s32.totalorder %s41, 4
        // Predicated region
        $region93: #{ka4ganc_forward.1} parent=75 // pred_check
          %p1080 = pneg %p1079
        $region94: #{ka4ganc_forward.1} parent=75 // pred_check_branch
          %1082 = sbr.rel (%p1080) target = $region96
        $region95: #{ka4ganc_forward.1} parent=75 // pred_region
          %v1083 = vld [vmem:[%s1] sm:$0xf]
          %v1084 = vld [vmem:[%s1 + $0x4] sm:$0xf]
          %v1085 = vld [vmem:[#allocation3] sm:$0xff]
          %v1088 = vunpack.c.l.b16 %v1083
          %v1089 = vunpack.c.l.b16 %v1084
          %v1090 = vpack.c.b16 %v1089, %v1088
          %vm1091 = vcmask 130048
          %v1093 = vsel %vm1091, %v1090, 0
          %1095 = vmatprep.subr.bf16.mxu0 0
          %1096 = vmatpush1.bf16.msra.mxu0 %v1085
          %1097 = vmatprep.subr.bf16.mxu0 0
          %1098 = vmatpush1.bf16.msra.mxu0 0
          %1099 = vmatprep.subr.bf16.mxu0 0
          %1100 = vmatpush1.bf16.msra.mxu0 0
          %1101 = vmatprep.subr.bf16.mxu0 0
          %1102 = vmatpush1.bf16.msra.mxu0 0
          %1103 = vmatprep.subr.bf16.mxu0 0
          %1104 = vmatpush1.bf16.msra.mxu0 0
          %1105 = vmatprep.subr.bf16.mxu0 0
          %1106 = vmatpush1.bf16.msra.mxu0 0
          %1107 = vmatprep.subr.bf16.mxu0 0
          %1108 = vmatpush1.bf16.msra.mxu0 0
          %1109 = vmatprep.subr.bf16.mxu0 0
          %1110 = vmatpush1.bf16.msra.mxu0 0
          %1111 = vmatprep.subr.bf16.mxu0 0
          %1112 = vmatpush1.bf16.msra.mxu0 0
          %1113 = vmatprep.subr.bf16.mxu0 0
          %1114 = vmatpush1.bf16.msra.mxu0 0
          %1115 = vmatprep.subr.bf16.mxu0 0
          %1116 = vmatpush1.bf16.msra.mxu0 0
          %1117 = vmatprep.subr.bf16.mxu0 0
          %1118 = vmatpush1.bf16.msra.mxu0 0
          %1119 = vmatprep.subr.bf16.mxu0 0
          %1120 = vmatpush1.bf16.msra.mxu0 0
          %1121 = vmatprep.subr.bf16.mxu0 0
          %1122 = vmatpush1.bf16.msra.mxu0 0
          %1123 = vmatprep.subr.bf16.mxu0 0
          %1124 = vmatpush1.bf16.msra.mxu0 0
          %1125 = vmatprep.subr.bf16.mxu0 0
          %1126 = vmatpush1.bf16.msra.mxu0 0
          %1127 = vmatprep.mubr.bf16.mxu0 0
          %1128 = vmatmul.mubr.bf16.gmra.mrb[0].mxu0 %v1093
          %v1129 = vpop.f32.mrb[0].mxu0
          %v1130 = vadd.f32 0.0, %v1129
          %v1131 = vpop.f32.mrb[0].mxu0
          %v1132 = vpop.f32.mrb[0].mxu0
          %v1133 = vadd.f32 0.0, %v1132
          %v1134 = vpop.f32.mrb[0].mxu0
          %1135 = vdwg.mxu0
          %v1136 = vpack.c.bf16 %v1133, %v1130
          %v1137 = vld [vmem:[%s8] sm:$0xf]
          %v1138 = vld [vmem:[%s8 + $0x4] sm:$0xf]
          %v1139 = vld [vmem:[%s8 + $0x8] sm:$0xf]
          %v1140 = vld [vmem:[%s8 + $0xc] sm:$0xf]
          %v1141 = vld [vmem:[%s8 + $0x10] sm:$0xf]
          %v1142 = vld [vmem:[%s8 + $0x14] sm:$0xf]
          %v1143 = vld [vmem:[%s8 + $0x18] sm:$0xf]
          %v1144 = vld [vmem:[%s8 + $0x1c] sm:$0xf]
          %v1145 = vld [vmem:[%s8 + $0x20] sm:$0xf]
          %v1146 = vld [vmem:[%s8 + $0x24] sm:$0xf]
          %v1147 = vld [vmem:[%s8 + $0x28] sm:$0xf]
          %v1148 = vld [vmem:[%s8 + $0x2c] sm:$0xf]
          %v1149 = vld [vmem:[%s8 + $0x30] sm:$0xf]
          %v1150 = vld [vmem:[%s8 + $0x34] sm:$0xf]
          %v1151 = vld [vmem:[%s8 + $0x38] sm:$0xf]
          %v1152 = vld [vmem:[%s8 + $0x3c] sm:$0xf]
          %v1169 = vunpack.c.l.b16 %v1137
          %v1170 = vunpack.c.l.b16 %v1138
          %v1171 = vunpack.c.l.b16 %v1139
          %v1172 = vunpack.c.l.b16 %v1140
          %v1173 = vunpack.c.l.b16 %v1141
          %v1174 = vunpack.c.l.b16 %v1142
          %v1175 = vunpack.c.l.b16 %v1143
          %v1176 = vunpack.c.l.b16 %v1144
          %v1177 = vunpack.c.l.b16 %v1145
          %v1178 = vunpack.c.l.b16 %v1146
          %v1179 = vunpack.c.l.b16 %v1147
          %v1180 = vunpack.c.l.b16 %v1148
          %v1181 = vunpack.c.l.b16 %v1149
          %v1182 = vunpack.c.l.b16 %v1150
          %v1183 = vunpack.c.l.b16 %v1151
          %v1184 = vunpack.c.l.b16 %v1152
          %v1185 = vpack.c.b16 %v1170, %v1169
          %v1186 = vpack.c.b16 %v1172, %v1171
          %v1187 = vpack.c.b16 %v1174, %v1173
          %v1188 = vpack.c.b16 %v1176, %v1175
          %v1189 = vpack.c.b16 %v1178, %v1177
          %v1190 = vpack.c.b16 %v1180, %v1179
          %v1191 = vpack.c.b16 %v1182, %v1181
          %v1192 = vpack.c.b16 %v1184, %v1183
          %1201 = vmatprep.subr.bf16.mxu0 0
          %1202 = vmatpush1.bf16.msra.mxu0 %v1185
          %1203 = vmatprep.subr.bf16.mxu0 0
          %1204 = vmatpush1.bf16.msra.mxu0 %v1186
          %1205 = vmatprep.subr.bf16.mxu0 0
          %1206 = vmatpush1.bf16.msra.mxu0 %v1187
          %1207 = vmatprep.subr.bf16.mxu0 0
          %1208 = vmatpush1.bf16.msra.mxu0 %v1188
          %1209 = vmatprep.subr.bf16.mxu0 0
          %1210 = vmatpush1.bf16.msra.mxu0 %v1189
          %1211 = vmatprep.subr.bf16.mxu0 0
          %1212 = vmatpush1.bf16.msra.mxu0 %v1190
          %1213 = vmatprep.subr.bf16.mxu0 0
          %1214 = vmatpush1.bf16.msra.mxu0 %v1191
          %1215 = vmatprep.subr.bf16.mxu0 0
          %1216 = vmatpush1.bf16.msra.mxu0 %v1192
          %1217 = vmatprep.subr.bf16.mxu0 0
          %1218 = vmatpush1.bf16.msra.mxu0 0
          %1219 = vmatprep.subr.bf16.mxu0 0
          %1220 = vmatpush1.bf16.msra.mxu0 0
          %1221 = vmatprep.subr.bf16.mxu0 0
          %1222 = vmatpush1.bf16.msra.mxu0 0
          %1223 = vmatprep.subr.bf16.mxu0 0
          %1224 = vmatpush1.bf16.msra.mxu0 0
          %1225 = vmatprep.subr.bf16.mxu0 0
          %1226 = vmatpush1.bf16.msra.mxu0 0
          %1227 = vmatprep.subr.bf16.mxu0 0
          %1228 = vmatpush1.bf16.msra.mxu0 0
          %1229 = vmatprep.subr.bf16.mxu0 0
          %1230 = vmatpush1.bf16.msra.mxu0 0
          %1231 = vmatprep.subr.bf16.mxu0 0
          %1232 = vmatpush1.bf16.msra.mxu0 0
          %1233 = vmatprep.mubr.bf16.mxu0 0
          %1234 = vmatmul.mubr.bf16.gmra.mrb[0].mxu0 %v1136
          %v1235 = vpop.f32.mrb[0].mxu0
          %v1236 = vadd.f32 0.0, %v1235
          %v1237 = vpop.f32.mrb[0].mxu0
          %v1238 = vpop.f32.mrb[0].mxu0
          %v1239 = vadd.f32 0.0, %v1238
          %v1240 = vpop.f32.mrb[0].mxu0
          %1241 = vdwg.mxu0
          %vm1242 = vcmp.ge.f32.partialorder %v1236, 0.0
          %vm1243 = vcmp.ge.f32.partialorder %v1239, 0.0
          %v1244 = vmul.f32 %v1236, 0.01
          %v1245 = vmul.f32 %v1239, 0.01
          %v1246 = vsel %vm1242, %v1236, %v1244
          %v1247 = vsel %vm1243, %v1239, %v1245
          %v1248 = vpack.c.bf16 %v1247, %v1246
          %v1249 = vld [vmem:[%s9] sm:$0xff]
          %v1250 = vld [vmem:[%s9 + $0x8] sm:$0xff]
          %v1251 = vld [vmem:[%s9 + $0x10] sm:$0xff]
          %v1252 = vld [vmem:[%s9 + $0x18] sm:$0xff]
          %v1253 = vld [vmem:[%s9 + $0x20] sm:$0xff]
          %v1254 = vld [vmem:[%s9 + $0x28] sm:$0xff]
          %v1255 = vld [vmem:[%s9 + $0x30] sm:$0xff]
          %v1256 = vld [vmem:[%s9 + $0x38] sm:$0xff]
          %v1257 = vld [vmem:[%s9 + $0x40] sm:$0xff]
          %v1258 = vld [vmem:[%s9 + $0x48] sm:$0xff]
          %v1259 = vld [vmem:[%s9 + $0x50] sm:$0xff]
          %v1260 = vld [vmem:[%s9 + $0x58] sm:$0xff]
          %v1261 = vld [vmem:[%s9 + $0x60] sm:$0xff]
          %v1262 = vld [vmem:[%s9 + $0x68] sm:$0xff]
          %v1263 = vld [vmem:[%s9 + $0x70] sm:$0xff]
          %v1264 = vld [vmem:[%s9 + $0x78] sm:$0xff]
          %v1265 = vld [vmem:[%s10] sm:$0x3]
          %v1267 = vlaneseq
          %v1268 = vshrl.u32 %v1267, 7
          %v1269 = vsub.s32 0, %v1268
          %v1270 = vrot.slane %v1265, %v1269
          %v1271 = vlaneseq
          %v1272 = vshrl.u32 %v1271, 7
          %v1273 = vsub.s32 1, %v1272
          %v1274 = vrot.slane %v1265, %v1273
          %v1293 = vunpack.c.l.b16 %v1249
          %v1294 = vunpack.c.h.b16 %v1249
          %v1295 = vunpack.c.l.b16 %v1250
          %v1296 = vunpack.c.h.b16 %v1250
          %v1297 = vunpack.c.l.b16 %v1251
          %v1298 = vunpack.c.h.b16 %v1251
          %v1299 = vunpack.c.l.b16 %v1252
          %v1300 = vunpack.c.h.b16 %v1252
          %v1301 = vunpack.c.l.b16 %v1253
          %v1302 = vunpack.c.h.b16 %v1253
          %v1303 = vunpack.c.l.b16 %v1254
          %v1304 = vunpack.c.h.b16 %v1254
          %v1305 = vunpack.c.l.b16 %v1255
          %v1306 = vunpack.c.h.b16 %v1255
          %v1307 = vunpack.c.l.b16 %v1256
          %v1308 = vunpack.c.h.b16 %v1256
          %v1309 = vunpack.c.l.b16 %v1257
          %v1310 = vunpack.c.h.b16 %v1257
          %v1311 = vunpack.c.l.b16 %v1258
          %v1312 = vunpack.c.h.b16 %v1258
          %v1313 = vunpack.c.l.b16 %v1259
          %v1314 = vunpack.c.h.b16 %v1259
          %v1315 = vunpack.c.l.b16 %v1260
          %v1316 = vunpack.c.h.b16 %v1260
          %v1317 = vunpack.c.l.b16 %v1261
          %v1318 = vunpack.c.h.b16 %v1261
          %v1319 = vunpack.c.l.b16 %v1262
          %v1320 = vunpack.c.h.b16 %v1262
          %v1321 = vunpack.c.l.b16 %v1263
          %v1322 = vunpack.c.h.b16 %v1263
          %v1323 = vunpack.c.l.b16 %v1264
          %v1324 = vunpack.c.h.b16 %v1264
          %v1325 = vpack.c.b16 %v1295, %v1293
          %v1326 = vpack.c.b16 %v1296, %v1294
          %v1327 = vpack.c.b16 %v1299, %v1297
          %v1328 = vpack.c.b16 %v1300, %v1298
          %v1329 = vpack.c.b16 %v1303, %v1301
          %v1330 = vpack.c.b16 %v1304, %v1302
          %v1331 = vpack.c.b16 %v1307, %v1305
          %v1332 = vpack.c.b16 %v1308, %v1306
          %v1333 = vpack.c.b16 %v1311, %v1309
          %v1334 = vpack.c.b16 %v1312, %v1310
          %v1335 = vpack.c.b16 %v1315, %v1313
          %v1336 = vpack.c.b16 %v1316, %v1314
          %v1337 = vpack.c.b16 %v1319, %v1317
          %v1338 = vpack.c.b16 %v1320, %v1318
          %v1339 = vpack.c.b16 %v1323, %v1321
          %v1340 = vpack.c.b16 %v1324, %v1322
          %1357 = vmatprep.subr.bf16.mxu0 %v1326
          %1358 = vmatpush1.bf16.msra.mxu0 %v1325
          %1359 = vmatprep.subr.bf16.mxu0 %v1328
          %1360 = vmatpush1.bf16.msra.mxu0 %v1327
          %1361 = vmatprep.subr.bf16.mxu0 %v1330
          %1362 = vmatpush1.bf16.msra.mxu0 %v1329
          %1363 = vmatprep.subr.bf16.mxu0 %v1332
          %1364 = vmatpush1.bf16.msra.mxu0 %v1331
          %1365 = vmatprep.subr.bf16.mxu0 %v1334
          %1366 = vmatpush1.bf16.msra.mxu0 %v1333
          %1367 = vmatprep.subr.bf16.mxu0 %v1336
          %1368 = vmatpush1.bf16.msra.mxu0 %v1335
          %1369 = vmatprep.subr.bf16.mxu0 %v1338
          %1370 = vmatpush1.bf16.msra.mxu0 %v1337
          %1371 = vmatprep.subr.bf16.mxu0 %v1340
          %1372 = vmatpush1.bf16.msra.mxu0 %v1339
          %1373 = vmatprep.subr.bf16.mxu0 0
          %1374 = vmatpush1.bf16.msra.mxu0 0
          %1375 = vmatprep.subr.bf16.mxu0 0
          %1376 = vmatpush1.bf16.msra.mxu0 0
          %1377 = vmatprep.subr.bf16.mxu0 0
          %1378 = vmatpush1.bf16.msra.mxu0 0
          %1379 = vmatprep.subr.bf16.mxu0 0
          %1380 = vmatpush1.bf16.msra.mxu0 0
          %1381 = vmatprep.subr.bf16.mxu0 0
          %1382 = vmatpush1.bf16.msra.mxu0 0
          %1383 = vmatprep.subr.bf16.mxu0 0
          %1384 = vmatpush1.bf16.msra.mxu0 0
          %1385 = vmatprep.subr.bf16.mxu0 0
          %1386 = vmatpush1.bf16.msra.mxu0 0
          %1387 = vmatprep.subr.bf16.mxu0 0
          %1388 = vmatpush1.bf16.msra.mxu0 0
          %1389 = vmatprep.mubr.bf16.mxu0 0
          %1390 = vmatmul.mubr.bf16.gmra.mrb[0].mxu0 %v1248
          %v1391 = vpop.f32.mrb[0].mxu0
          %v1392 = vadd.f32 %v1270, %v1391
          %v1393 = vpop.f32.mrb[0].mxu0
          %v1394 = vadd.f32 %v1274, %v1393
          %v1395 = vpop.f32.mrb[0].mxu0
          %v1396 = vadd.f32 %v1270, %v1395
          %v1397 = vpop.f32.mrb[0].mxu0
          %v1398 = vadd.f32 %v1274, %v1397
          %1399 = vdwg.mxu0
          %v1400 = vpack.c.bf16 %v1396, %v1392
          %v1401 = vpack.c.bf16 %v1398, %v1394
          %v1402 = vld [vmem:[%s11] sm:$0xf]
          %v1403 = vld [vmem:[%s11 + $0x4] sm:$0xf]
          %v1404 = vld [vmem:[%s11 + $0x8] sm:$0xf]
          %v1405 = vld [vmem:[%s11 + $0xc] sm:$0xf]
          %v1406 = vld [vmem:[%s11 + $0x10] sm:$0xf]
          %v1407 = vld [vmem:[%s11 + $0x14] sm:$0xf]
          %v1408 = vld [vmem:[%s11 + $0x18] sm:$0xf]
          %v1409 = vld [vmem:[%s11 + $0x1c] sm:$0xf]
          %v1410 = vld [vmem:[%s11 + $0x20] sm:$0xf]
          %v1411 = vld [vmem:[%s11 + $0x24] sm:$0xf]
          %v1412 = vld [vmem:[%s11 + $0x28] sm:$0xf]
          %v1413 = vld [vmem:[%s11 + $0x2c] sm:$0xf]
          %v1414 = vld [vmem:[%s11 + $0x30] sm:$0xf]
          %v1415 = vld [vmem:[%s11 + $0x34] sm:$0xf]
          %v1416 = vld [vmem:[%s11 + $0x38] sm:$0xf]
          %v1417 = vld [vmem:[%s11 + $0x3c] sm:$0xf]
          %v1418 = vld [vmem:[%s13] sm:$0x1]
          %v1420 = vlaneseq
          %v1421 = vshrl.u32 %v1420, 7
          %v1422 = vsub.s32 0, %v1421
          %v1423 = vrot.slane %v1418, %v1422
          %v1441 = vunpack.c.l.b16 %v1402
          %v1442 = vunpack.c.l.b16 %v1403
          %v1443 = vunpack.c.l.b16 %v1404
          %v1444 = vunpack.c.l.b16 %v1405
          %v1445 = vunpack.c.l.b16 %v1406
          %v1446 = vunpack.c.l.b16 %v1407
          %v1447 = vunpack.c.l.b16 %v1408
          %v1448 = vunpack.c.l.b16 %v1409
          %v1449 = vunpack.c.l.b16 %v1410
          %v1450 = vunpack.c.l.b16 %v1411
          %v1451 = vunpack.c.l.b16 %v1412
          %v1452 = vunpack.c.l.b16 %v1413
          %v1453 = vunpack.c.l.b16 %v1414
          %v1454 = vunpack.c.l.b16 %v1415
          %v1455 = vunpack.c.l.b16 %v1416
          %v1456 = vunpack.c.l.b16 %v1417
          %v1457 = vpack.c.b16 %v1442, %v1441
          %v1458 = vpack.c.b16 %v1444, %v1443
          %v1459 = vpack.c.b16 %v1446, %v1445
          %v1460 = vpack.c.b16 %v1448, %v1447
          %v1461 = vpack.c.b16 %v1450, %v1449
          %v1462 = vpack.c.b16 %v1452, %v1451
          %v1463 = vpack.c.b16 %v1454, %v1453
          %v1464 = vpack.c.b16 %v1456, %v1455
          %1473 = vmatprep.subr.bf16.mxu0 0
          %1474 = vmatpush1.bf16.msra.mxu0 %v1457
          %1475 = vmatprep.subr.bf16.mxu0 0
          %1476 = vmatpush1.bf16.msra.mxu0 %v1458
          %1477 = vmatprep.subr.bf16.mxu0 0
          %1478 = vmatpush1.bf16.msra.mxu0 %v1459
          %1479 = vmatprep.subr.bf16.mxu0 0
          %1480 = vmatpush1.bf16.msra.mxu0 %v1460
          %1481 = vmatprep.subr.bf16.mxu0 0
          %1482 = vmatpush1.bf16.msra.mxu0 %v1461
          %1483 = vmatprep.subr.bf16.mxu0 0
          %1484 = vmatpush1.bf16.msra.mxu0 %v1462
          %1485 = vmatprep.subr.bf16.mxu0 0
          %1486 = vmatpush1.bf16.msra.mxu0 %v1463
          %1487 = vmatprep.subr.bf16.mxu0 0
          %1488 = vmatpush1.bf16.msra.mxu0 %v1464
          %1489 = vmatprep.subr.bf16.mxu0 0
          %1490 = vmatpush1.bf16.msra.mxu0 0
          %1491 = vmatprep.subr.bf16.mxu0 0
          %1492 = vmatpush1.bf16.msra.mxu0 0
          %1493 = vmatprep.subr.bf16.mxu0 0
          %1494 = vmatpush1.bf16.msra.mxu0 0
          %1495 = vmatprep.subr.bf16.mxu0 0
          %1496 = vmatpush1.bf16.msra.mxu0 0
          %1497 = vmatprep.subr.bf16.mxu0 0
          %1498 = vmatpush1.bf16.msra.mxu0 0
          %1499 = vmatprep.subr.bf16.mxu0 0
          %1500 = vmatpush1.bf16.msra.mxu0 0
          %1501 = vmatprep.subr.bf16.mxu0 0
          %1502 = vmatpush1.bf16.msra.mxu0 0
          %1503 = vmatprep.subr.bf16.mxu0 0
          %1504 = vmatpush1.bf16.msra.mxu0 0
          %1505 = vmatprep.mubr.bf16.mxu0 0
          %1506 = vmatmul.mubr.bf16.gmra.mrb[0].mxu0 %v1400
          %v1507 = vpop.f32.mrb[0].mxu0
          %v1508 = vadd.f32 %v1423, %v1507
          %v1509 = vpop.f32.mrb[0].mxu0
          %v1510 = vpop.f32.mrb[0].mxu0
          %v1511 = vadd.f32 %v1423, %v1510
          %v1512 = vpop.f32.mrb[0].mxu0
          %1513 = vdwg.mxu0
          %v1514 = vld [vmem:[%s12] sm:$0xf]
          %v1515 = vld [vmem:[%s12 + $0x4] sm:$0xf]
          %v1516 = vld [vmem:[%s12 + $0x8] sm:$0xf]
          %v1517 = vld [vmem:[%s12 + $0xc] sm:$0xf]
          %v1518 = vld [vmem:[%s12 + $0x10] sm:$0xf]
          %v1519 = vld [vmem:[%s12 + $0x14] sm:$0xf]
          %v1520 = vld [vmem:[%s12 + $0x18] sm:$0xf]
          %v1521 = vld [vmem:[%s12 + $0x1c] sm:$0xf]
          %v1522 = vld [vmem:[%s12 + $0x20] sm:$0xf]
          %v1523 = vld [vmem:[%s12 + $0x24] sm:$0xf]
          %v1524 = vld [vmem:[%s12 + $0x28] sm:$0xf]
          %v1525 = vld [vmem:[%s12 + $0x2c] sm:$0xf]
          %v1526 = vld [vmem:[%s12 + $0x30] sm:$0xf]
          %v1527 = vld [vmem:[%s12 + $0x34] sm:$0xf]
          %v1528 = vld [vmem:[%s12 + $0x38] sm:$0xf]
          %v1529 = vld [vmem:[%s12 + $0x3c] sm:$0xf]
          %v1530 = vld [vmem:[%s14] sm:$0x1]
          %v1532 = vlaneseq
          %v1533 = vshrl.u32 %v1532, 7
          %v1534 = vsub.s32 0, %v1533
          %v1535 = vrot.slane %v1530, %v1534
          %v1553 = vunpack.c.l.b16 %v1514
          %v1554 = vunpack.c.l.b16 %v1515
          %v1555 = vunpack.c.l.b16 %v1516
          %v1556 = vunpack.c.l.b16 %v1517
          %v1557 = vunpack.c.l.b16 %v1518
          %v1558 = vunpack.c.l.b16 %v1519
          %v1559 = vunpack.c.l.b16 %v1520
          %v1560 = vunpack.c.l.b16 %v1521
          %v1561 = vunpack.c.l.b16 %v1522
          %v1562 = vunpack.c.l.b16 %v1523
          %v1563 = vunpack.c.l.b16 %v1524
          %v1564 = vunpack.c.l.b16 %v1525
          %v1565 = vunpack.c.l.b16 %v1526
          %v1566 = vunpack.c.l.b16 %v1527
          %v1567 = vunpack.c.l.b16 %v1528
          %v1568 = vunpack.c.l.b16 %v1529
          %v1569 = vpack.c.b16 %v1554, %v1553
          %v1570 = vpack.c.b16 %v1556, %v1555
          %v1571 = vpack.c.b16 %v1558, %v1557
          %v1572 = vpack.c.b16 %v1560, %v1559
          %v1573 = vpack.c.b16 %v1562, %v1561
          %v1574 = vpack.c.b16 %v1564, %v1563
          %v1575 = vpack.c.b16 %v1566, %v1565
          %v1576 = vpack.c.b16 %v1568, %v1567
          %1585 = vmatprep.subr.bf16.mxu0 0
          %1586 = vmatpush1.bf16.msra.mxu0 %v1569
          %1587 = vmatprep.subr.bf16.mxu0 0
          %1588 = vmatpush1.bf16.msra.mxu0 %v1570
          %1589 = vmatprep.subr.bf16.mxu0 0
          %1590 = vmatpush1.bf16.msra.mxu0 %v1571
          %1591 = vmatprep.subr.bf16.mxu0 0
          %1592 = vmatpush1.bf16.msra.mxu0 %v1572
          %1593 = vmatprep.subr.bf16.mxu0 0
          %1594 = vmatpush1.bf16.msra.mxu0 %v1573
          %1595 = vmatprep.subr.bf16.mxu0 0
          %1596 = vmatpush1.bf16.msra.mxu0 %v1574
          %1597 = vmatprep.subr.bf16.mxu0 0
          %1598 = vmatpush1.bf16.msra.mxu0 %v1575
          %1599 = vmatprep.subr.bf16.mxu0 0
          %1600 = vmatpush1.bf16.msra.mxu0 %v1576
          %1601 = vmatprep.subr.bf16.mxu0 0
          %1602 = vmatpush1.bf16.msra.mxu0 0
          %1603 = vmatprep.subr.bf16.mxu0 0
          %1604 = vmatpush1.bf16.msra.mxu0 0
          %1605 = vmatprep.subr.bf16.mxu0 0
          %1606 = vmatpush1.bf16.msra.mxu0 0
          %1607 = vmatprep.subr.bf16.mxu0 0
          %1608 = vmatpush1.bf16.msra.mxu0 0
          %1609 = vmatprep.subr.bf16.mxu0 0
          %1610 = vmatpush1.bf16.msra.mxu0 0
          %1611 = vmatprep.subr.bf16.mxu0 0
          %1612 = vmatpush1.bf16.msra.mxu0 0
          %1613 = vmatprep.subr.bf16.mxu0 0
          %1614 = vmatpush1.bf16.msra.mxu0 0
          %1615 = vmatprep.subr.bf16.mxu0 0
          %1616 = vmatpush1.bf16.msra.mxu0 0
          %1617 = vmatprep.mubr.bf16.mxu0 0
          %1618 = vmatmul.mubr.bf16.gmra.mrb[0].mxu0 %v1401
          %v1619 = vpop.f32.mrb[0].mxu0
          %v1620 = vadd.f32 %v1535, %v1619
          %v1621 = vpop.f32.mrb[0].mxu0
          %v1622 = vpop.f32.mrb[0].mxu0
          %v1623 = vadd.f32 %v1535, %v1622
          %v1624 = vpop.f32.mrb[0].mxu0
          %1625 = vdwg.mxu0
          %s1626 = scalar_lea.vmem [#allocation8], %s504
          %1627 = vst [vmem:[%s1626] sm:$0xff] %v1508
          %1628 = vst [vmem:[%s1626 + $0x8] sm:$0xff] %v1511
          %s1629 = scalar_lea.vmem [#allocation10], %s504
          %1630 = vst [vmem:[%s1629] sm:$0xff] %v1620
          %1631 = vst [vmem:[%s1629 + $0x8] sm:$0xff] %v1623
        $region96: #{ka4ganc_forward.1} parent=75 // pred_fallthru
          _
        %p1632 = scmp.eq.s32.totalorder %s42, 0
        %p1633 = pnand %p1079, %p1632
        %p1634 = pneg %p1633
        // Predicated region
        $region97: #{ka4ganc_forward.1} parent=75 // pred_check
          _
        $region98: #{ka4ganc_forward.1} parent=75 // pred_check_branch
          %1636 = sbr.rel (%p1633) target = $region100
        $region99: #{ka4ganc_forward.1} parent=75 // pred_region
          %1637 = vst [vmem:[#allocation4] sm:$0xff] 0.0
          %1638 = vst [vmem:[#allocation4 + $0x8] sm:$0xff] 0.0
          %1639 = vst [vmem:[#allocation4 + $0x10] sm:$0xff] 0.0
          %1640 = vst [vmem:[#allocation4 + $0x18] sm:$0xff] 0.0
          %1641 = vst [vmem:[#allocation4 + $0x20] sm:$0xff] 0.0
          %1642 = vst [vmem:[#allocation4 + $0x28] sm:$0xff] 0.0
          %1643 = vst [vmem:[#allocation4 + $0x30] sm:$0xff] 0.0
          %1644 = vst [vmem:[#allocation4 + $0x38] sm:$0xff] 0.0
          %1645 = vst [vmem:[#allocation4 + $0x40] sm:$0xff] 0.0
          %1646 = vst [vmem:[#allocation4 + $0x48] sm:$0xff] 0.0
          %1647 = vst [vmem:[#allocation4 + $0x50] sm:$0xff] 0.0
          %1648 = vst [vmem:[#allocation4 + $0x58] sm:$0xff] 0.0
          %1649 = vst [vmem:[#allocation4 + $0x60] sm:$0xff] 0.0
          %1650 = vst [vmem:[#allocation4 + $0x68] sm:$0xff] 0.0
          %1651 = vst [vmem:[#allocation4 + $0x70] sm:$0xff] 0.0
          %1652 = vst [vmem:[#allocation4 + $0x78] sm:$0xff] 0.0
          %1653 = vst [vmem:[#allocation5] sm:$0xff] 0.0
          %1654 = vst [vmem:[#allocation5 + $0x8] sm:$0xff] 0.0
          %1655 = vst [vmem:[#allocation5 + $0x10] sm:$0xff] 0.0
          %1656 = vst [vmem:[#allocation5 + $0x18] sm:$0xff] 0.0
          %1657 = vst [vmem:[#allocation5 + $0x20] sm:$0xff] 0.0
          %1658 = vst [vmem:[#allocation5 + $0x28] sm:$0xff] 0.0
          %1659 = vst [vmem:[#allocation5 + $0x30] sm:$0xff] 0.0
          %1660 = vst [vmem:[#allocation5 + $0x38] sm:$0xff] 0.0
          %1661 = vst [vmem:[#allocation5 + $0x40] sm:$0xff] 0.0
          %1662 = vst [vmem:[#allocation5 + $0x48] sm:$0xff] 0.0
          %1663 = vst [vmem:[#allocation5 + $0x50] sm:$0xff] 0.0
          %1664 = vst [vmem:[#allocation5 + $0x58] sm:$0xff] 0.0
          %1665 = vst [vmem:[#allocation5 + $0x60] sm:$0xff] 0.0
          %1666 = vst [vmem:[#allocation5 + $0x68] sm:$0xff] 0.0
          %1667 = vst [vmem:[#allocation5 + $0x70] sm:$0xff] 0.0
          %1668 = vst [vmem:[#allocation5 + $0x78] sm:$0xff] 0.0
          loop: start=0, step=1, limit=8
          $region101: #{ka4ganc_forward.1} parent=99 // loop_pre_header
            _
          $region102: #{ka4ganc_forward.1} parent=99 // loop_header
            %s1670 = sphi 0, %s1674
            %p1671 = scmp.ge.s32.totalorder %s1670, 8
          $region103: #{ka4ganc_forward.1} parent=99 // loop_header_branch
            %1673 = sbr.rel (%p1671) target = $region107
          $region104: #{ka4ganc_forward.1} parent=99 // loop_body
            %s1675 = smul.u32 %s1670, 128
            %s1676 = sld [smem:[#allocation7 + %s1675]]
            %p1677 = scmp.gt.s32.totalorder %s1676, 0
            %s1678 = scalar_select %p1677, %s1676, 0
            %p1679 = scmp.lt.s32.totalorder %s1678, 15
            %s1680 = scalar_select %p1679, %s1678, 15
            %s1681 = sadd.s32 %s1675, 1
            %s1682 = sld [smem:[#allocation7 + %s1681]]
            %p1683 = scmp.gt.s32.totalorder %s1682, 0
            %s1684 = scalar_select %p1683, %s1682, 0
            %p1685 = scmp.lt.s32.totalorder %s1684, 15
            %s1686 = scalar_select %p1685, %s1684, 15
            %s1687 = scalar_lea.vmem [#allocation8], %s1680
            %v1688 = vld [vmem:[%s1687] sm:$0x1]
            %s1689 = scalar_lea.vmem [#allocation4], %s1670
            %1690 = vst [vmem:[%s1689] sm:$0x1] %v1688
            %s1691 = scalar_lea.vmem [#allocation10], %s1686
            %v1692 = vld [vmem:[%s1691] sm:$0x1]
            %s1693 = scalar_lea.vmem [#allocation5], %s1670
            %1694 = vst [vmem:[%s1693] sm:$0x1] %v1692
          $region105: #{ka4ganc_forward.1} parent=99 // loop_footer
            %s1674 = sadd.s32 1, %s1670
          $region106: #{ka4ganc_forward.1} parent=99 // loop_footer_branch
            %1669 = sbr.rel target = $region102
          $region107: #{ka4ganc_forward.1} parent=99 // loop_exit
            _
          %v1695 = vld [vmem:[#allocation4] sm:$0xff]
          %v1696 = vld [vmem:[#allocation4 + $0x8] sm:$0xff]
          %v1697 = vld [vmem:[#allocation4 + $0x10] sm:$0xff]
          %v1698 = vld [vmem:[#allocation4 + $0x18] sm:$0xff]
          %v1699 = vld [vmem:[#allocation4 + $0x20] sm:$0xff]
          %v1700 = vld [vmem:[#allocation4 + $0x28] sm:$0xff]
          %v1701 = vld [vmem:[#allocation4 + $0x30] sm:$0xff]
          %v1702 = vld [vmem:[#allocation4 + $0x38] sm:$0xff]
          %v1703 = vld [vmem:[#allocation4 + $0x40] sm:$0xff]
          %v1704 = vld [vmem:[#allocation4 + $0x48] sm:$0xff]
          %v1705 = vld [vmem:[#allocation4 + $0x50] sm:$0xff]
          %v1706 = vld [vmem:[#allocation4 + $0x58] sm:$0xff]
          %v1707 = vld [vmem:[#allocation4 + $0x60] sm:$0xff]
          %v1708 = vld [vmem:[#allocation4 + $0x68] sm:$0xff]
          %v1709 = vld [vmem:[#allocation4 + $0x70] sm:$0xff]
          %v1710 = vld [vmem:[#allocation4 + $0x78] sm:$0xff]
          %v1711 = vld [vmem:[#allocation5] sm:$0xff]
          %v1712 = vld [vmem:[#allocation5 + $0x8] sm:$0xff]
          %v1713 = vld [vmem:[#allocation5 + $0x10] sm:$0xff]
          %v1714 = vld [vmem:[#allocation5 + $0x18] sm:$0xff]
          %v1715 = vld [vmem:[#allocation5 + $0x20] sm:$0xff]
          %v1716 = vld [vmem:[#allocation5 + $0x28] sm:$0xff]
          %v1717 = vld [vmem:[#allocation5 + $0x30] sm:$0xff]
          %v1718 = vld [vmem:[#allocation5 + $0x38] sm:$0xff]
          %v1719 = vld [vmem:[#allocation5 + $0x40] sm:$0xff]
          %v1720 = vld [vmem:[#allocation5 + $0x48] sm:$0xff]
          %v1721 = vld [vmem:[#allocation5 + $0x50] sm:$0xff]
          %v1722 = vld [vmem:[#allocation5 + $0x58] sm:$0xff]
          %v1723 = vld [vmem:[#allocation5 + $0x60] sm:$0xff]
          %v1724 = vld [vmem:[#allocation5 + $0x68] sm:$0xff]
          %v1725 = vld [vmem:[#allocation5 + $0x70] sm:$0xff]
          %v1726 = vld [vmem:[#allocation5 + $0x78] sm:$0xff]
          %v1727 = vmul.f32 %v1695, %v1711
          %v1728 = vmul.f32 %v1696, %v1712
          %v1729 = vmul.f32 %v1697, %v1713
          %v1730 = vmul.f32 %v1698, %v1714
          %v1731 = vmul.f32 %v1699, %v1715
          %v1732 = vmul.f32 %v1700, %v1716
          %v1733 = vmul.f32 %v1701, %v1717
          %v1734 = vmul.f32 %v1702, %v1718
          %v1735 = vmul.f32 %v1703, %v1719
          %v1736 = vmul.f32 %v1704, %v1720
          %v1737 = vmul.f32 %v1705, %v1721
          %v1738 = vmul.f32 %v1706, %v1722
          %v1739 = vmul.f32 %v1707, %v1723
          %v1740 = vmul.f32 %v1708, %v1724
          %v1741 = vmul.f32 %v1709, %v1725
          %v1742 = vmul.f32 %v1710, %v1726
          %1743 = vmatprep.subr.mxu0 0.0
          %1744 = vmatpush1.xpose.msra.mxu0 %v1727
          %1745 = vmatprep.subr.mxu0 0.0
          %1746 = vmatpush1.xpose.msra.mxu0 %v1728
          %1747 = vmatprep.subr.mxu0 0.0
          %1748 = vmatpush1.xpose.msra.mxu0 %v1729
          %1749 = vmatprep.subr.mxu0 0.0
          %1750 = vmatpush1.xpose.msra.mxu0 %v1730
          %1751 = vmatprep.subr.mxu0 0.0
          %1752 = vmatpush1.xpose.msra.mxu0 %v1731
          %1753 = vmatprep.subr.mxu0 0.0
          %1754 = vmatpush1.xpose.msra.mxu0 %v1732
          %1755 = vmatprep.subr.mxu0 0.0
          %1756 = vmatpush1.xpose.msra.mxu0 %v1733
          %1757 = vmatprep.subr.mxu0 0.0
          %1758 = vmatpush1.xpose.msra.mxu0 %v1734
          %1759 = vmatprep.subr.mxu0 0.0
          %1760 = vmatpush1.xpose.msra.mxu0 %v1735
          %1761 = vmatprep.subr.mxu0 0.0
          %1762 = vmatpush1.xpose.msra.mxu0 %v1736
          %1763 = vmatprep.subr.mxu0 0.0
          %1764 = vmatpush1.xpose.msra.mxu0 %v1737
          %1765 = vmatprep.subr.mxu0 0.0
          %1766 = vmatpush1.xpose.msra.mxu0 %v1738
          %1767 = vmatprep.subr.mxu0 0.0
          %1768 = vmatpush1.xpose.msra.mxu0 %v1739
          %1769 = vmatprep.subr.mxu0 0.0
          %1770 = vmatpush1.xpose.msra.mxu0 %v1740
          %1771 = vmatprep.subr.mxu0 0.0
          %1772 = vmatpush1.xpose.msra.mxu0 %v1741
          %1773 = vmatprep.subr.mxu0 0.0
          %1774 = vmatpush1.xpose.msra.mxu0 %v1742
          %1775 = vmatprep.subr.mxu0 0.0
          %1776 = vmatpush1.xpose.msra.mxu0 0.0
          %1777 = vmatprep.subr.mxu0 0.0
          %1778 = vmatpush1.xpose.msra.mxu0 0.0
          %1779 = vmatprep.subr.mxu0 0.0
          %1780 = vmatpush1.xpose.msra.mxu0 0.0
          %1781 = vmatprep.subr.mxu0 0.0
          %1782 = vmatpush1.xpose.msra.mxu0 0.0
          %1783 = vmatprep.subr.mxu0 0.0
          %1784 = vmatpush1.xpose.msra.mxu0 0.0
          %1785 = vmatprep.subr.mxu0 0.0
          %1786 = vmatpush1.xpose.msra.mxu0 0.0
          %1787 = vmatprep.subr.mxu0 0.0
          %1788 = vmatpush1.xpose.msra.mxu0 0.0
          %1789 = vmatprep.subr.mxu0 0.0
          %1790 = vmatpush1.xpose.msra.mxu0 0.0
          %1791 = vmatprep.subr.mxu0 0.0
          %1792 = vmatpush1.xpose.msra.mxu0 0.0
          %1793 = vmatprep.subr.mxu0 0.0
          %1794 = vmatpush1.xpose.msra.mxu0 0.0
          %1795 = vmatprep.subr.mxu0 0.0
          %1796 = vmatpush1.xpose.msra.mxu0 0.0
          %1797 = vmatprep.subr.mxu0 0.0
          %1798 = vmatpush1.xpose.msra.mxu0 0.0
          %1799 = vmatprep.subr.mxu0 0.0
          %1800 = vmatpush1.xpose.msra.mxu0 0.0
          %1801 = vmatprep.subr.mxu0 0.0
          %1802 = vmatpush1.xpose.msra.mxu0 0.0
          %1803 = vmatprep.subr.mxu0 0.0
          %1804 = vmatpush1.xpose.msra.mxu0 0.0
          %1805 = vmatprep.subr.mxu0 0.0
          %1806 = vmatpush1.xpose.msra.mxu0 0.0
          %1807 = vmatprep.mubr.f32.mxu0 0.0
          %1808 = vmatmul.mubr.f32.gmra.mrb[0].mxu0 1.0
          %v1809 = vpop.f32.mrb[0].mxu0
          %v1810 = vadd.f32 0.0, %v1809
          %v1811 = vpop.f32.mrb[0].mxu0
          %1812 = vdwg.mxu0
          %1813 = vst [vmem:[%s17] sm:$0x1] %v1810
        $region100: #{ka4ganc_forward.1} parent=75 // pred_fallthru
          _
        // Predicated region
        $region108: #{ka4ganc_forward.1} parent=75 // pred_check
          %p1814 = pneg %p356
        $region109: #{ka4ganc_forward.1} parent=75 // pred_check_branch
          %1816 = sbr.rel (%p1814) target = $region111
        $region110: #{ka4ganc_forward.1} parent=75 // pred_region
          %s1818 = ssub.s32 256, 256
          %1819 = vsyncadd [#allocation9], %s1818
          %s1820 = sshll.u32 [#allocation8], 4
          %s1821 = int_to_ptr.vmem [resolvable:$true] %s1820
          %1826 = dma.vmem_to_hbm [thread:$0]  %s1821, 256, %s15, [#allocation9], 128, 128, 8
        $region111: #{ka4ganc_forward.1} parent=75 // pred_fallthru
          _
        // Predicated region
        $region112: #{ka4ganc_forward.1} parent=75 // pred_check
          %p1827 = pneg %p377
        $region113: #{ka4ganc_forward.1} parent=75 // pred_check_branch
          %1829 = sbr.rel (%p1827) target = $region115
        $region114: #{ka4ganc_forward.1} parent=75 // pred_region
          %s1831 = ssub.s32 256, 256
          %1832 = vsyncadd [#allocation11], %s1831
          %s1833 = sshll.u32 [#allocation10], 4
          %s1834 = int_to_ptr.vmem [resolvable:$true] %s1833
          %1839 = dma.vmem_to_hbm [thread:$0]  %s1834, 256, %s16, [#allocation11], 128, 128, 8
        $region115: #{ka4ganc_forward.1} parent=75 // pred_fallthru
          _
        // Predicated region
        $region116: #{ka4ganc_forward.1} parent=75 // pred_check
          %p1840 = pneg %p398
        $region117: #{ka4ganc_forward.1} parent=75 // pred_check_branch
          %1842 = sbr.rel (%p1840) target = $region119
        $region118: #{ka4ganc_forward.1} parent=75 // pred_region
          _
        $region119: #{ka4ganc_forward.1} parent=75 // pred_fallthru
          _
        // Predicated region
        $region120: #{ka4ganc_forward.1} parent=75 // pred_check
          %p1843 = pneg %p356
        $region121: #{ka4ganc_forward.1} parent=75 // pred_check_branch
          %1845 = sbr.rel (%p1843) target = $region123
        $region122: #{ka4ganc_forward.1} parent=75 // pred_region
          %1846 = dma.done [#allocation9], 256
        $region123: #{ka4ganc_forward.1} parent=75 // pred_fallthru
          _
        // Predicated region
        $region124: #{ka4ganc_forward.1} parent=75 // pred_check
          %p1847 = pneg %p377
        $region125: #{ka4ganc_forward.1} parent=75 // pred_check_branch
          %1849 = sbr.rel (%p1847) target = $region127
        $region126: #{ka4ganc_forward.1} parent=75 // pred_region
          %1850 = dma.done [#allocation11], 256
        $region127: #{ka4ganc_forward.1} parent=75 // pred_fallthru
          _
        // Predicated region
        $region128: #{ka4ganc_forward.1} parent=75 // pred_check
          %p1851 = pneg %p398
        $region129: #{ka4ganc_forward.1} parent=75 // pred_check_branch
          %1853 = sbr.rel (%p1851) target = $region131
        $region130: #{ka4ganc_forward.1} parent=75 // pred_region
          _
        $region131: #{ka4ganc_forward.1} parent=75 // pred_fallthru
          _
      $region76: #{ka4ganc_forward.1} parent=5 // pred_fallthru
        _
      %p1854 = scmp.le.s32.totalorder 2, %s32
      // Predicated region
      $region132: #{ka4ganc_forward.1} parent=5 // pred_check
        %p1855 = pneg %p1854
      $region133: #{ka4ganc_forward.1} parent=5 // pred_check_branch
        %1857 = sbr.rel (%p1855) target = $region135
      $region134: #{ka4ganc_forward.1} parent=5 // pred_region
        %s1858 = ssub.s32 %s32, 2
      $region135: #{ka4ganc_forward.1} parent=5 // pred_fallthru
        _
    $region6: #{ka4ganc_forward.1} parent=1 // loop_footer
      %s36 = sadd.s32 1, %s32
    $region7: #{ka4ganc_forward.1} parent=1 // loop_footer_branch
      %31 = sbr.rel target = $region3
    $region8: #{ka4ganc_forward.1} parent=1 // loop_exit
      _
    %1859 = vsyncpa [#allocation9], 1
    %s1860 = scalar_lea.sflag [#allocation9], 1
    %1861 = vsyncpa %s1860, 1
    %1862 = vsyncpa [#allocation11], 1

</llo_original>
